<compile_context>
chip_gen: v5e
topology: v5e:2x2
jax: 0.10.0
libtpu: 0.0.40
codegen_flags: <defaults>
</compile_context>

<pallas_src>
import functools

import numpy as np

import jax
import jax.numpy as jnp
from jax.experimental import pallas as pl
from jax.experimental.pallas import tpu as pltpu


def _dilated_block_kernel(x_ref, wconv_ref, wpw_ref, bpw_ref, skip_ref, halo_ref,
                          *, dilations, kernel_size, halo_width):
  """All L residual layers for one (batch, time-tile) grid step.

  x_ref:     (1, C, TT)     current time tile of the block input.
  wconv_ref: (L, C, k*C)    dilated conv weights, taps folded:
                            Wflat[l, o, j*C + c] = W_torch[l][o, c, j].
  wpw_ref:   (L, 2C, C)     merged 1x1 weights: rows [0,C) residual, [C,2C) skip.
  bpw_ref:   (L, 2C, 1)     merged 1x1 biases.
  skip_ref:  (L, 1, C, TT)  stacked skip outputs.
  halo_ref:  (L, C, HW)     VMEM scratch: last HW time samples of each layer's
                            input from the previous time tile (causal halo).
  """
  t_idx = pl.program_id(1)
  c = x_ref.shape[1]
  tt = x_ref.shape[2]
  hw = halo_width
  k = kernel_size

  # Causal zero padding: clear the carried halo at the first time tile.
  @pl.when(t_idx == 0)
  def _():
    halo_ref[...] = jnp.zeros_like(halo_ref)

  x = x_ref[0].astype(jnp.float32)                                # (C, TT)
  lane_idx = jax.lax.broadcasted_iota(jnp.int32, (c, tt), 1)
  zeros_left = jnp.zeros((c, tt - hw), jnp.float32) if tt > hw else None

  for l, d in enumerate(dilations):
    pad = (k - 1) * d
    halo_aligned = None
    if pad > 0:
      hbuf = halo_ref[l]                       # previous tile's tail (old halo)
      halo_ref[l] = x[:, tt - hw:]             # save this layer's tail for next tile
      # (C, TT) array whose last HW lanes hold the halo; the concat boundary is
      # 128-aligned, so this is just vreg placement (no cross-lane shuffles).
      halo_aligned = (hbuf if tt == hw
                      else jnp.concatenate([zeros_left, hbuf], axis=1))

    # Build the k dilated taps: tap_j[:, t] = x_causal[:, t + j*d - pad].
    taps = []
    for j in range(k):
      s = pad - j * d                          # right-shift amount for this tap
      if s == 0:
        taps.append(x)
      else:
        comb = jnp.where(lane_idx < tt - s, x, halo_aligned)
        taps.append(pltpu.roll(comb, shift=s, axis=1))   # XLU rotate (free slot)
    x_taps = taps[0] if k == 1 else jnp.concatenate(taps, axis=0)   # (k*C, TT)

    # Dilated causal conv as one folded MXU matmul, then gated activation (EUP).
    y = jnp.dot(wconv_ref[l], x_taps, preferred_element_type=jnp.float32)
    g = jnp.tanh(y) * jax.nn.sigmoid(y)

    # Merged residual/skip 1x1 convs: one (2C, C) x (C, TT) matmul, split rows.
    rs = jnp.dot(wpw_ref[l], g, preferred_element_type=jnp.float32) + bpw_ref[l]
    skip_ref[l, 0] = rs[c:].astype(skip_ref.dtype)
    x = rs[:c] + x                             # residual -> next layer's input


def dilated_residual_block_pallas(x, layer_params, dilations, *,
                                  time_tile=4096, out_dtype=None,
                                  vmem_budget_bytes=16 * 1024 * 1024):
  """Full DilatedResidualBlock.forward. x: (N, C, T) NCW. Returns (L, N, C, T)."""
  n, c, t = x.shape
  num_l = len(dilations)
  assert len(layer_params) == num_l
  k = layer_params[0][0].shape[2]
  out_dtype = out_dtype if out_dtype is not None else x.dtype

  # Stack the (tiny) per-layer weights so they stay VMEM-resident in the kernel.
  w_conv_flat = jnp.stack(
      [jnp.transpose(p[0], (0, 2, 1)).reshape(c, k * c) for p in layer_params])
  w_pw = jnp.stack([jnp.concatenate([p[1], p[3]], axis=0) for p in layer_params])
  b_pw = jnp.stack([jnp.concatenate([p[2], p[4]], axis=0) for p in layer_params])

  lane = 128
  max_pad = max((k - 1) * d for d in dilations)
  hw = lane * max(1, pl.cdiv(max_pad, lane))    # halo width: >= max_pad, 128-mult

  # Pick a big lane-dense time tile under a conservative VMEM budget (v7x has
  # only 64 MiB physical / 32 MiB default scoped VMEM): double-buffered I/O
  # blocks plus generously-counted f32 intermediates of the unrolled layer loop.
  bytes_per_col = (2 * c * x.dtype.itemsize
                   + 2 * num_l * c * np.dtype(out_dtype).itemsize
                   + 4 * c * num_l * (3 * k + 6))
  tt_budget = max(lane, (vmem_budget_bytes // bytes_per_col) // lane * lane)
  tt = min(time_tile, tt_budget, lane * pl.cdiv(t, lane))
  tt = max(tt, hw, lane)
  tt = lane * pl.cdiv(tt, lane)

  # Pad T to the tile multiple ONCE for the whole block (right pad only, so the
  # causal outputs in [0, t) are unaffected); slice the stacked skips once.
  t_padded = tt * pl.cdiv(t, tt)
  x_in = jnp.pad(x, ((0, 0), (0, 0), (0, t_padded - t))) if t_padded != t else x
  num_t = t_padded // tt

  kernel = functools.partial(_dilated_block_kernel,
                             dilations=tuple(int(d) for d in dilations),
                             kernel_size=k, halo_width=hw)

  skip = pl.pallas_call(
      kernel,
      out_shape=jax.ShapeDtypeStruct((num_l, n, c, t_padded), out_dtype),
      grid_spec=pltpu.PrefetchScalarGridSpec(
          num_scalar_prefetch=0,
          grid=(n, num_t),
          in_specs=[
              # Input x: one time tile per step; read exactly once from HBM.
              pl.BlockSpec((1, c, tt), lambda b, i: (b, 0, i)),
              # Stacked weights: constant block index -> fetched once, resident.
              pl.BlockSpec((num_l, c, k * c), lambda b, i: (0, 0, 0)),
              pl.BlockSpec((num_l, 2 * c, c), lambda b, i: (0, 0, 0)),
              pl.BlockSpec((num_l, 2 * c, 1), lambda b, i: (0, 0, 0)),
          ],
          out_specs=pl.BlockSpec((num_l, 1, c, tt), lambda b, i: (0, b, 0, i)),
          scratch_shapes=[pltpu.VMEM((num_l, c, hw), jnp.float32)],
      ),
      compiler_params=pltpu.CompilerParams(
          # Batch is "parallel" (v7x megacore splits it across TCs); the time
          # axis must be "arbitrary" because the causal halo is carried across
          # time tiles in VMEM scratch (reset at t_idx == 0).
          dimension_semantics=("parallel", "arbitrary"),
          vmem_limit_bytes=32 * 1024 * 1024,
      ),
  )(x_in, w_conv_flat, w_pw, b_pw)

  if t_padded != t:
    skip = skip[:, :, :, :t]
  return skip


# ----------------------------- pure-JAX reference ---------------------------


def _dilated_residual_layer_ref(x, w_conv, w_res, b_res, w_skip, b_skip, dilation):
  k = w_conv.shape[2]
  pad = (k - 1) * dilation
  y = jax.lax.conv_general_dilated(
      x, w_conv, window_strides=(1,), padding=[(pad, 0)],
      rhs_dilation=(dilation,), dimension_numbers=("NCH", "OIH", "NCH"),
      precision=jax.lax.Precision.HIGHEST)
  g = jnp.tanh(y) * jax.nn.sigmoid(y)
  res = jnp.einsum("oc,nct->not", w_res, g,
                   precision=jax.lax.Precision.HIGHEST) + b_res[None] + x
  skip = jnp.einsum("oc,nct->not", w_skip, g,
                    precision=jax.lax.Precision.HIGHEST) + b_skip[None]
  return res, skip


def dilated_residual_block_ref(x, layer_params, dilations):
  skips = []
  for dilation, p in zip(dilations, layer_params):
    x, s = _dilated_residual_layer_ref(x, *p, dilation)
    skips.append(s)
  return jnp.stack(skips)


if __name__ == "__main__":
  # Small hyperparameters consistent with the PyTorch module.
  batch = 2
  in_channels = 8          # sublane-aligned small channel count
  kernel_size = 2
  num_layers = 3
  num_stack = 2
  seq_len = 300            # exercises the single pad-to-tile + final slice path

  # DilatedResidualBlock.get_dilations()
  dilations = [2 ** i for _ in range(num_stack) for i in range(num_layers)]
  # NOTE: skip_channels is unused by the PyTorch layer (skip conv is C->C).

  key = jax.random.PRNGKey(0)
  layer_params = []
  for _ in dilations:
    key, k1, k2, k3, k4, k5 = jax.random.split(key, 6)
    w_conv = 0.3 * jax.random.normal(
        k1, (in_channels, in_channels, kernel_size), jnp.float32)
    w_res = 0.3 * jax.random.normal(k2, (in_channels, in_channels), jnp.float32)
    b_res = 0.1 * jax.random.normal(k3, (in_channels, 1), jnp.float32)
    w_skip = 0.3 * jax.random.normal(k4, (in_channels, in_channels), jnp.float32)
    b_skip = 0.1 * jax.random.normal(k5, (in_channels, 1), jnp.float32)
    layer_params.append((w_conv, w_res, b_res, w_skip, b_skip))

  key, kx = jax.random.split(key)
  x = jax.random.normal(kx, (batch, in_channels, seq_len), jnp.float32)

  ref = dilated_residual_block_ref(x, layer_params, dilations)
  expected_shape = (len(dilations), batch, in_channels, seq_len)

  # 1) Default (large) time tile: whole padded sequence in one tile.
  out = dilated_residual_block_pallas(x, layer_params, dilations)
  out = jax.block_until_ready(out)
  assert out.shape == expected_shape, out.shape
  err = float(jnp.max(jnp.abs(out - ref)))
  assert jnp.allclose(out, ref, atol=2e-3, rtol=2e-3), (
      "single-tile mismatch vs reference, max abs err = %g" % err)

  # 2) Small time tile: exercises the carried-halo multi-time-tile path.
  out2 = dilated_residual_block_pallas(x, layer_params, dilations, time_tile=128)
  out2 = jax.block_until_ready(out2)
  assert out2.shape == expected_shape, out2.shape
  err2 = float(jnp.max(jnp.abs(out2 - ref)))
  assert jnp.allclose(out2, ref, atol=2e-3, rtol=2e-3), (
      "multi-tile mismatch vs reference, max abs err = %g" % err2)

  print("KERNEL_OK")
</pallas_src>

<mosaic_0001>
module attributes {stable_mosaic.version = 11 : i64} {
  func.func @_dilated_block_kernel(%arg0: i32, %arg1: i32, %arg2: memref<1x8x384xf32, #tpu.memory_space<vmem>>, %arg3: memref<6x8x16xf32, #tpu.memory_space<vmem>>, %arg4: memref<6x16x8xf32, #tpu.memory_space<vmem>>, %arg5: memref<6x16x1xf32, #tpu.memory_space<vmem>>, %arg6: memref<6x1x8x384xf32, #tpu.memory_space<vmem>>, %arg7: memref<6x8x128xf32, #tpu.memory_space<vmem>>) attributes {dimension_semantics = [#tpu.dimension_semantics<parallel>, #tpu.dimension_semantics<arbitrary>], iteration_bounds = array<i64: 2, 1>, scalar_prefetch = 0 : i64, scratch_operands = 1 : i64, tpu.core_type = #tpu.core_type<tc>, window_params = [{transform_indices = @transform_0, window_bounds = array<i64: 1, 8, 384>}, {pipeline_mode = #tpu.pipeline_mode<synchronous>, transform_indices = @transform_1, window_bounds = array<i64: 6, 8, 16>}, {pipeline_mode = #tpu.pipeline_mode<synchronous>, transform_indices = @transform_2, window_bounds = array<i64: 6, 16, 8>}, {pipeline_mode = #tpu.pipeline_mode<synchronous>, transform_indices = @transform_3, window_bounds = array<i64: 6, 16, 1>}, {transform_indices = @transform_4, window_bounds = array<i64: 6, 1, 8, 384>}]} {
    %c0_i32 = arith.constant 0 : i32
    %0 = arith.cmpi eq, %arg1, %c0_i32 : i32
    %1 = arith.extui %0 : i1 to i32
    %c0_i32_0 = arith.constant 0 : i32
    %2 = arith.cmpi ne, %1, %c0_i32_0 : i32
    scf.if %2 {
      %cst_136 = arith.constant 0.000000e+00 : f32
      %215 = vector.broadcast %cst_136 : f32 to vector<6x8x128xf32>
      %c0_137 = arith.constant 0 : index
      %c0_138 = arith.constant 0 : index
      %c0_139 = arith.constant 0 : index
      %216 = vector.load %arg7[%c0_137, %c0_138, %c0_139] : memref<6x8x128xf32, #tpu.memory_space<vmem>>, vector<6x8x128xf32>
      tpu.vector_store %arg7[%c0_137, %c0_138, %c0_139], %215 {strides = array<i32>} : memref<6x8x128xf32, #tpu.memory_space<vmem>>, vector<6x8x128xf32>,
    } else {
    }
    %c0 = arith.constant 0 : index
    %c0_1 = arith.constant 0 : index
    %c0_2 = arith.constant 0 : index
    %3 = vector.load %arg2[%c0, %c0_1, %c0_2] : memref<1x8x384xf32, #tpu.memory_space<vmem>>, vector<1x8x384xf32>
    %4 = vector.shape_cast %3 : vector<1x8x384xf32> to vector<8x384xf32>
    %5 = tpu.iota {dimensions = array<i32: 1>} : vector<8x384xi32>
    %cst = arith.constant 0.000000e+00 : f32
    %6 = vector.broadcast %cst : f32 to vector<8x256xf32>
    %c0_3 = arith.constant 0 : index
    %c0_4 = arith.constant 0 : index
    %c0_5 = arith.constant 0 : index
    %7 = vector.load %arg7[%c0_3, %c0_4, %c0_5] : memref<6x8x128xf32, #tpu.memory_space<vmem>>, vector<1x8x128xf32>
    %8 = vector.shape_cast %7 : vector<1x8x128xf32> to vector<8x128xf32>
    %9 = vector.extract_strided_slice %4 {offsets = [0, 256], sizes = [8, 128], strides = [1, 1]} : vector<8x384xf32> to vector<8x128xf32>
    %c0_6 = arith.constant 0 : index
    %c0_7 = arith.constant 0 : index
    %c0_8 = arith.constant 0 : index
    %10 = vector.load %arg7[%c0_6, %c0_7, %c0_8] : memref<6x8x128xf32, #tpu.memory_space<vmem>>, vector<1x8x128xf32>
    %11 = vector.shape_cast %10 : vector<1x8x128xf32> to vector<8x128xf32>
    %12 = vector.shape_cast %9 : vector<8x128xf32> to vector<1x8x128xf32>
    tpu.vector_store %arg7[%c0_6, %c0_7, %c0_8], %12 {strides = array<i32>} : memref<6x8x128xf32, #tpu.memory_space<vmem>>, vector<1x8x128xf32>,
    %13 = tpu.concatenate %6, %8 in 1 : vector<8x256xf32>, vector<8x128xf32> -> vector<8x384xf32>
    %c383_i32 = arith.constant 383 : i32
    %14 = vector.broadcast %c383_i32 : i32 to vector<8x384xi32>
    %15 = arith.cmpi slt, %5, %14 : vector<8x384xi32>
    %16 = arith.select %15, %4, %13 : vector<8x384xi1>, vector<8x384xf32>
    %c1_i32 = arith.constant 1 : i32
    %17 = tpu.dynamic_rotate %16 by %c1_i32 dim 1 : vector<8x384xf32>, i32 -> vector<8x384xf32>
    %18 = tpu.concatenate %17, %4 in 0 : vector<8x384xf32>, vector<8x384xf32> -> vector<16x384xf32>
    %c0_9 = arith.constant 0 : index
    %c0_10 = arith.constant 0 : index
    %c0_11 = arith.constant 0 : index
    %19 = vector.load %arg3[%c0_9, %c0_10, %c0_11] : memref<6x8x16xf32, #tpu.memory_space<vmem>>, vector<1x8x16xf32>
    %20 = vector.shape_cast %19 : vector<1x8x16xf32> to vector<8x16xf32>
    %cst_12 = arith.constant dense<0.000000e+00> : vector<8x384xf32>
    %21 = tpu.matmul %20, %18, %cst_12 {dimension_numbers = #tpu.dot_dimension_numbers<[1], [0], [0], [1], [0, 0, 1, 1], [], []>} : vector<8x16xf32>, vector<16x384xf32>, vector<8x384xf32> -> vector<8x384xf32>
    %22 = math.tanh %21 : vector<8x384xf32>
    %23 = arith.negf %21 : vector<8x384xf32>
    %24 = math.exp %23 : vector<8x384xf32>
    %cst_13 = arith.constant 1.000000e+00 : f32
    %25 = vector.broadcast %cst_13 : f32 to vector<8x384xf32>
    %26 = arith.addf %25, %24 : vector<8x384xf32>
    %27 = arith.divf %25, %26 : vector<8x384xf32>
    %28 = arith.mulf %22, %27 : vector<8x384xf32>
    %c0_14 = arith.constant 0 : index
    %c0_15 = arith.constant 0 : index
    %c0_16 = arith.constant 0 : index
    %29 = vector.load %arg4[%c0_14, %c0_15, %c0_16] : memref<6x16x8xf32, #tpu.memory_space<vmem>>, vector<1x16x8xf32>
    %30 = vector.shape_cast %29 : vector<1x16x8xf32> to vector<16x8xf32>
    %cst_17 = arith.constant dense<0.000000e+00> : vector<16x384xf32>
    %31 = tpu.matmul %30, %28, %cst_17 {dimension_numbers = #tpu.dot_dimension_numbers<[1], [0], [0], [1], [0, 0, 1, 1], [], []>} : vector<16x8xf32>, vector<8x384xf32>, vector<16x384xf32> -> vector<16x384xf32>
    %c0_18 = arith.constant 0 : index
    %c0_19 = arith.constant 0 : index
    %c0_20 = arith.constant 0 : index
    %32 = vector.load %arg5[%c0_18, %c0_19, %c0_20] : memref<6x16x1xf32, #tpu.memory_space<vmem>>, vector<1x16x1xf32>
    %33 = vector.shape_cast %32 : vector<1x16x1xf32> to vector<16x1xf32>
    %34 = vector.broadcast %33 : vector<16x1xf32> to vector<16x384xf32>
    %35 = arith.addf %31, %34 : vector<16x384xf32>
    %36 = vector.extract_strided_slice %35 {offsets = [8, 0], sizes = [8, 384], strides = [1, 1]} : vector<16x384xf32> to vector<8x384xf32>
    %c0_21 = arith.constant 0 : index
    %c0_22 = arith.constant 0 : index
    %c0_23 = arith.constant 0 : index
    %c0_24 = arith.constant 0 : index
    %37 = vector.load %arg6[%c0_21, %c0_22, %c0_23, %c0_24] : memref<6x1x8x384xf32, #tpu.memory_space<vmem>>, vector<1x1x8x384xf32>
    %38 = vector.shape_cast %37 : vector<1x1x8x384xf32> to vector<8x384xf32>
    %39 = vector.shape_cast %36 : vector<8x384xf32> to vector<1x1x8x384xf32>
    tpu.vector_store %arg6[%c0_21, %c0_22, %c0_23, %c0_24], %39 {strides = array<i32>} : memref<6x1x8x384xf32, #tpu.memory_space<vmem>>, vector<1x1x8x384xf32>,
    %40 = vector.extract_strided_slice %35 {offsets = [0, 0], sizes = [8, 384], strides = [1, 1]} : vector<16x384xf32> to vector<8x384xf32>
    %41 = arith.addf %40, %4 : vector<8x384xf32>
    %c1 = arith.constant 1 : index
    %c0_25 = arith.constant 0 : index
    %c0_26 = arith.constant 0 : index
    %42 = vector.load %arg7[%c1, %c0_25, %c0_26] : memref<6x8x128xf32, #tpu.memory_space<vmem>>, vector<1x8x128xf32>
    %43 = vector.shape_cast %42 : vector<1x8x128xf32> to vector<8x128xf32>
    %44 = vector.extract_strided_slice %41 {offsets = [0, 256], sizes = [8, 128], strides = [1, 1]} : vector<8x384xf32> to vector<8x128xf32>
    %c1_27 = arith.constant 1 : index
    %c0_28 = arith.constant 0 : index
    %c0_29 = arith.constant 0 : index
    %45 = vector.load %arg7[%c1_27, %c0_28, %c0_29] : memref<6x8x128xf32, #tpu.memory_space<vmem>>, vector<1x8x128xf32>
    %46 = vector.shape_cast %45 : vector<1x8x128xf32> to vector<8x128xf32>
    %47 = vector.shape_cast %44 : vector<8x128xf32> to vector<1x8x128xf32>
    tpu.vector_store %arg7[%c1_27, %c0_28, %c0_29], %47 {strides = array<i32>} : memref<6x8x128xf32, #tpu.memory_space<vmem>>, vector<1x8x128xf32>,
    %48 = tpu.concatenate %6, %43 in 1 : vector<8x256xf32>, vector<8x128xf32> -> vector<8x384xf32>
    %c382_i32 = arith.constant 382 : i32
    %49 = vector.broadcast %c382_i32 : i32 to vector<8x384xi32>
    %50 = arith.cmpi slt, %5, %49 : vector<8x384xi32>
    %51 = arith.select %50, %41, %48 : vector<8x384xi1>, vector<8x384xf32>
    %c2_i32 = arith.constant 2 : i32
    %52 = tpu.dynamic_rotate %51 by %c2_i32 dim 1 : vector<8x384xf32>, i32 -> vector<8x384xf32>
    %53 = tpu.concatenate %52, %41 in 0 : vector<8x384xf32>, vector<8x384xf32> -> vector<16x384xf32>
    %c1_30 = arith.constant 1 : index
    %c0_31 = arith.constant 0 : index
    %c0_32 = arith.constant 0 : index
    %54 = vector.load %arg3[%c1_30, %c0_31, %c0_32] : memref<6x8x16xf32, #tpu.memory_space<vmem>>, vector<1x8x16xf32>
    %55 = vector.shape_cast %54 : vector<1x8x16xf32> to vector<8x16xf32>
    %cst_33 = arith.constant dense<0.000000e+00> : vector<8x384xf32>
    %56 = tpu.matmul %55, %53, %cst_33 {dimension_numbers = #tpu.dot_dimension_numbers<[1], [0], [0], [1], [0, 0, 1, 1], [], []>} : vector<8x16xf32>, vector<16x384xf32>, vector<8x384xf32> -> vector<8x384xf32>
    %57 = math.tanh %56 : vector<8x384xf32>
    %58 = arith.negf %56 : vector<8x384xf32>
    %59 = math.exp %58 : vector<8x384xf32>
    %cst_34 = arith.constant 1.000000e+00 : f32
    %60 = vector.broadcast %cst_34 : f32 to vector<8x384xf32>
    %61 = arith.addf %60, %59 : vector<8x384xf32>
    %62 = arith.divf %60, %61 : vector<8x384xf32>
    %63 = arith.mulf %57, %62 : vector<8x384xf32>
    %c1_35 = arith.constant 1 : index
    %c0_36 = arith.constant 0 : index
    %c0_37 = arith.constant 0 : index
    %64 = vector.load %arg4[%c1_35, %c0_36, %c0_37] : memref<6x16x8xf32, #tpu.memory_space<vmem>>, vector<1x16x8xf32>
    %65 = vector.shape_cast %64 : vector<1x16x8xf32> to vector<16x8xf32>
    %cst_38 = arith.constant dense<0.000000e+00> : vector<16x384xf32>
    %66 = tpu.matmul %65, %63, %cst_38 {dimension_numbers = #tpu.dot_dimension_numbers<[1], [0], [0], [1], [0, 0, 1, 1], [], []>} : vector<16x8xf32>, vector<8x384xf32>, vector<16x384xf32> -> vector<16x384xf32>
    %c1_39 = arith.constant 1 : index
    %c0_40 = arith.constant 0 : index
    %c0_41 = arith.constant 0 : index
    %67 = vector.load %arg5[%c1_39, %c0_40, %c0_41] : memref<6x16x1xf32, #tpu.memory_space<vmem>>, vector<1x16x1xf32>
    %68 = vector.shape_cast %67 : vector<1x16x1xf32> to vector<16x1xf32>
    %69 = vector.broadcast %68 : vector<16x1xf32> to vector<16x384xf32>
    %70 = arith.addf %66, %69 : vector<16x384xf32>
    %71 = vector.extract_strided_slice %70 {offsets = [8, 0], sizes = [8, 384], strides = [1, 1]} : vector<16x384xf32> to vector<8x384xf32>
    %c1_42 = arith.constant 1 : index
    %c0_43 = arith.constant 0 : index
    %c0_44 = arith.constant 0 : index
    %c0_45 = arith.constant 0 : index
    %72 = vector.load %arg6[%c1_42, %c0_43, %c0_44, %c0_45] : memref<6x1x8x384xf32, #tpu.memory_space<vmem>>, vector<1x1x8x384xf32>
    %73 = vector.shape_cast %72 : vector<1x1x8x384xf32> to vector<8x384xf32>
    %74 = vector.shape_cast %71 : vector<8x384xf32> to vector<1x1x8x384xf32>
    tpu.vector_store %arg6[%c1_42, %c0_43, %c0_44, %c0_45], %74 {strides = array<i32>} : memref<6x1x8x384xf32, #tpu.memory_space<vmem>>, vector<1x1x8x384xf32>,
    %75 = vector.extract_strided_slice %70 {offsets = [0, 0], sizes = [8, 384], strides = [1, 1]} : vector<16x384xf32> to vector<8x384xf32>
    %76 = arith.addf %75, %41 : vector<8x384xf32>
    %c2 = arith.constant 2 : index
    %c0_46 = arith.constant 0 : index
    %c0_47 = arith.constant 0 : index
    %77 = vector.load %arg7[%c2, %c0_46, %c0_47] : memref<6x8x128xf32, #tpu.memory_space<vmem>>, vector<1x8x128xf32>
    %78 = vector.shape_cast %77 : vector<1x8x128xf32> to vector<8x128xf32>
    %79 = vector.extract_strided_slice %76 {offsets = [0, 256], sizes = [8, 128], strides = [1, 1]} : vector<8x384xf32> to vector<8x128xf32>
    %c2_48 = arith.constant 2 : index
    %c0_49 = arith.constant 0 : index
    %c0_50 = arith.constant 0 : index
    %80 = vector.load %arg7[%c2_48, %c0_49, %c0_50] : memref<6x8x128xf32, #tpu.memory_space<vmem>>, vector<1x8x128xf32>
    %81 = vector.shape_cast %80 : vector<1x8x128xf32> to vector<8x128xf32>
    %82 = vector.shape_cast %79 : vector<8x128xf32> to vector<1x8x128xf32>
    tpu.vector_store %arg7[%c2_48, %c0_49, %c0_50], %82 {strides = array<i32>} : memref<6x8x128xf32, #tpu.memory_space<vmem>>, vector<1x8x128xf32>,
    %83 = tpu.concatenate %6, %78 in 1 : vector<8x256xf32>, vector<8x128xf32> -> vector<8x384xf32>
    %c380_i32 = arith.constant 380 : i32
    %84 = vector.broadcast %c380_i32 : i32 to vector<8x384xi32>
    %85 = arith.cmpi slt, %5, %84 : vector<8x384xi32>
    %86 = arith.select %85, %76, %83 : vector<8x384xi1>, vector<8x384xf32>
    %c4_i32 = arith.constant 4 : i32
    %87 = tpu.dynamic_rotate %86 by %c4_i32 dim 1 : vector<8x384xf32>, i32 -> vector<8x384xf32>
    %88 = tpu.concatenate %87, %76 in 0 : vector<8x384xf32>, vector<8x384xf32> -> vector<16x384xf32>
    %c2_51 = arith.constant 2 : index
    %c0_52 = arith.constant 0 : index
    %c0_53 = arith.constant 0 : index
    %89 = vector.load %arg3[%c2_51, %c0_52, %c0_53] : memref<6x8x16xf32, #tpu.memory_space<vmem>>, vector<1x8x16xf32>
    %90 = vector.shape_cast %89 : vector<1x8x16xf32> to vector<8x16xf32>
    %cst_54 = arith.constant dense<0.000000e+00> : vector<8x384xf32>
    %91 = tpu.matmul %90, %88, %cst_54 {dimension_numbers = #tpu.dot_dimension_numbers<[1], [0], [0], [1], [0, 0, 1, 1], [], []>} : vector<8x16xf32>, vector<16x384xf32>, vector<8x384xf32> -> vector<8x384xf32>
    %92 = math.tanh %91 : vector<8x384xf32>
    %93 = arith.negf %91 : vector<8x384xf32>
    %94 = math.exp %93 : vector<8x384xf32>
    %cst_55 = arith.constant 1.000000e+00 : f32
    %95 = vector.broadcast %cst_55 : f32 to vector<8x384xf32>
    %96 = arith.addf %95, %94 : vector<8x384xf32>
    %97 = arith.divf %95, %96 : vector<8x384xf32>
    %98 = arith.mulf %92, %97 : vector<8x384xf32>
    %c2_56 = arith.constant 2 : index
    %c0_57 = arith.constant 0 : index
    %c0_58 = arith.constant 0 : index
    %99 = vector.load %arg4[%c2_56, %c0_57, %c0_58] : memref<6x16x8xf32, #tpu.memory_space<vmem>>, vector<1x16x8xf32>
    %100 = vector.shape_cast %99 : vector<1x16x8xf32> to vector<16x8xf32>
    %cst_59 = arith.constant dense<0.000000e+00> : vector<16x384xf32>
    %101 = tpu.matmul %100, %98, %cst_59 {dimension_numbers = #tpu.dot_dimension_numbers<[1], [0], [0], [1], [0, 0, 1, 1], [], []>} : vector<16x8xf32>, vector<8x384xf32>, vector<16x384xf32> -> vector<16x384xf32>
    %c2_60 = arith.constant 2 : index
    %c0_61 = arith.constant 0 : index
    %c0_62 = arith.constant 0 : index
    %102 = vector.load %arg5[%c2_60, %c0_61, %c0_62] : memref<6x16x1xf32, #tpu.memory_space<vmem>>, vector<1x16x1xf32>
    %103 = vector.shape_cast %102 : vector<1x16x1xf32> to vector<16x1xf32>
    %104 = vector.broadcast %103 : vector<16x1xf32> to vector<16x384xf32>
    %105 = arith.addf %101, %104 : vector<16x384xf32>
    %106 = vector.extract_strided_slice %105 {offsets = [8, 0], sizes = [8, 384], strides = [1, 1]} : vector<16x384xf32> to vector<8x384xf32>
    %c2_63 = arith.constant 2 : index
    %c0_64 = arith.constant 0 : index
    %c0_65 = arith.constant 0 : index
    %c0_66 = arith.constant 0 : index
    %107 = vector.load %arg6[%c2_63, %c0_64, %c0_65, %c0_66] : memref<6x1x8x384xf32, #tpu.memory_space<vmem>>, vector<1x1x8x384xf32>
    %108 = vector.shape_cast %107 : vector<1x1x8x384xf32> to vector<8x384xf32>
    %109 = vector.shape_cast %106 : vector<8x384xf32> to vector<1x1x8x384xf32>
    tpu.vector_store %arg6[%c2_63, %c0_64, %c0_65, %c0_66], %109 {strides = array<i32>} : memref<6x1x8x384xf32, #tpu.memory_space<vmem>>, vector<1x1x8x384xf32>,
    %110 = vector.extract_strided_slice %105 {offsets = [0, 0], sizes = [8, 384], strides = [1, 1]} : vector<16x384xf32> to vector<8x384xf32>
    %111 = arith.addf %110, %76 : vector<8x384xf32>
    %c3 = arith.constant 3 : index
    %c0_67 = arith.constant 0 : index
    %c0_68 = arith.constant 0 : index
    %112 = vector.load %arg7[%c3, %c0_67, %c0_68] : memref<6x8x128xf32, #tpu.memory_space<vmem>>, vector<1x8x128xf32>
    %113 = vector.shape_cast %112 : vector<1x8x128xf32> to vector<8x128xf32>
    %114 = vector.extract_strided_slice %111 {offsets = [0, 256], sizes = [8, 128], strides = [1, 1]} : vector<8x384xf32> to vector<8x128xf32>
    %c3_69 = arith.constant 3 : index
    %c0_70 = arith.constant 0 : index
    %c0_71 = arith.constant 0 : index
    %115 = vector.load %arg7[%c3_69, %c0_70, %c0_71] : memref<6x8x128xf32, #tpu.memory_space<vmem>>, vector<1x8x128xf32>
    %116 = vector.shape_cast %115 : vector<1x8x128xf32> to vector<8x128xf32>
    %117 = vector.shape_cast %114 : vector<8x128xf32> to vector<1x8x128xf32>
    tpu.vector_store %arg7[%c3_69, %c0_70, %c0_71], %117 {strides = array<i32>} : memref<6x8x128xf32, #tpu.memory_space<vmem>>, vector<1x8x128xf32>,
    %118 = tpu.concatenate %6, %113 in 1 : vector<8x256xf32>, vector<8x128xf32> -> vector<8x384xf32>
    %c383_i32_72 = arith.constant 383 : i32
    %119 = vector.broadcast %c383_i32_72 : i32 to vector<8x384xi32>
    %120 = arith.cmpi slt, %5, %119 : vector<8x384xi32>
    %121 = arith.select %120, %111, %118 : vector<8x384xi1>, vector<8x384xf32>
    %c1_i32_73 = arith.constant 1 : i32
    %122 = tpu.dynamic_rotate %121 by %c1_i32_73 dim 1 : vector<8x384xf32>, i32 -> vector<8x384xf32>
    %123 = tpu.concatenate %122, %111 in 0 : vector<8x384xf32>, vector<8x384xf32> -> vector<16x384xf32>
    %c3_74 = arith.constant 3 : index
    %c0_75 = arith.constant 0 : index
    %c0_76 = arith.constant 0 : index
    %124 = vector.load %arg3[%c3_74, %c0_75, %c0_76] : memref<6x8x16xf32, #tpu.memory_space<vmem>>, vector<1x8x16xf32>
    %125 = vector.shape_cast %124 : vector<1x8x16xf32> to vector<8x16xf32>
    %cst_77 = arith.constant dense<0.000000e+00> : vector<8x384xf32>
    %126 = tpu.matmul %125, %123, %cst_77 {dimension_numbers = #tpu.dot_dimension_numbers<[1], [0], [0], [1], [0, 0, 1, 1], [], []>} : vector<8x16xf32>, vector<16x384xf32>, vector<8x384xf32> -> vector<8x384xf32>
    %127 = math.tanh %126 : vector<8x384xf32>
    %128 = arith.negf %126 : vector<8x384xf32>
    %129 = math.exp %128 : vector<8x384xf32>
    %cst_78 = arith.constant 1.000000e+00 : f32
    %130 = vector.broadcast %cst_78 : f32 to vector<8x384xf32>
    %131 = arith.addf %130, %129 : vector<8x384xf32>
    %132 = arith.divf %130, %131 : vector<8x384xf32>
    %133 = arith.mulf %127, %132 : vector<8x384xf32>
    %c3_79 = arith.constant 3 : index
    %c0_80 = arith.constant 0 : index
    %c0_81 = arith.constant 0 : index
    %134 = vector.load %arg4[%c3_79, %c0_80, %c0_81] : memref<6x16x8xf32, #tpu.memory_space<vmem>>, vector<1x16x8xf32>
    %135 = vector.shape_cast %134 : vector<1x16x8xf32> to vector<16x8xf32>
    %cst_82 = arith.constant dense<0.000000e+00> : vector<16x384xf32>
    %136 = tpu.matmul %135, %133, %cst_82 {dimension_numbers = #tpu.dot_dimension_numbers<[1], [0], [0], [1], [0, 0, 1, 1], [], []>} : vector<16x8xf32>, vector<8x384xf32>, vector<16x384xf32> -> vector<16x384xf32>
    %c3_83 = arith.constant 3 : index
    %c0_84 = arith.constant 0 : index
    %c0_85 = arith.constant 0 : index
    %137 = vector.load %arg5[%c3_83, %c0_84, %c0_85] : memref<6x16x1xf32, #tpu.memory_space<vmem>>, vector<1x16x1xf32>
    %138 = vector.shape_cast %137 : vector<1x16x1xf32> to vector<16x1xf32>
    %139 = vector.broadcast %138 : vector<16x1xf32> to vector<16x384xf32>
    %140 = arith.addf %136, %139 : vector<16x384xf32>
    %141 = vector.extract_strided_slice %140 {offsets = [8, 0], sizes = [8, 384], strides = [1, 1]} : vector<16x384xf32> to vector<8x384xf32>
    %c3_86 = arith.constant 3 : index
    %c0_87 = arith.constant 0 : index
    %c0_88 = arith.constant 0 : index
    %c0_89 = arith.constant 0 : index
    %142 = vector.load %arg6[%c3_86, %c0_87, %c0_88, %c0_89] : memref<6x1x8x384xf32, #tpu.memory_space<vmem>>, vector<1x1x8x384xf32>
    %143 = vector.shape_cast %142 : vector<1x1x8x384xf32> to vector<8x384xf32>
    %144 = vector.shape_cast %141 : vector<8x384xf32> to vector<1x1x8x384xf32>
    tpu.vector_store %arg6[%c3_86, %c0_87, %c0_88, %c0_89], %144 {strides = array<i32>} : memref<6x1x8x384xf32, #tpu.memory_space<vmem>>, vector<1x1x8x384xf32>,
    %145 = vector.extract_strided_slice %140 {offsets = [0, 0], sizes = [8, 384], strides = [1, 1]} : vector<16x384xf32> to vector<8x384xf32>
    %146 = arith.addf %145, %111 : vector<8x384xf32>
    %c4 = arith.constant 4 : index
    %c0_90 = arith.constant 0 : index
    %c0_91 = arith.constant 0 : index
    %147 = vector.load %arg7[%c4, %c0_90, %c0_91] : memref<6x8x128xf32, #tpu.memory_space<vmem>>, vector<1x8x128xf32>
    %148 = vector.shape_cast %147 : vector<1x8x128xf32> to vector<8x128xf32>
    %149 = vector.extract_strided_slice %146 {offsets = [0, 256], sizes = [8, 128], strides = [1, 1]} : vector<8x384xf32> to vector<8x128xf32>
    %c4_92 = arith.constant 4 : index
    %c0_93 = arith.constant 0 : index
    %c0_94 = arith.constant 0 : index
    %150 = vector.load %arg7[%c4_92, %c0_93, %c0_94] : memref<6x8x128xf32, #tpu.memory_space<vmem>>, vector<1x8x128xf32>
    %151 = vector.shape_cast %150 : vector<1x8x128xf32> to vector<8x128xf32>
    %152 = vector.shape_cast %149 : vector<8x128xf32> to vector<1x8x128xf32>
    tpu.vector_store %arg7[%c4_92, %c0_93, %c0_94], %152 {strides = array<i32>} : memref<6x8x128xf32, #tpu.memory_space<vmem>>, vector<1x8x128xf32>,
    %153 = tpu.concatenate %6, %148 in 1 : vector<8x256xf32>, vector<8x128xf32> -> vector<8x384xf32>
    %c382_i32_95 = arith.constant 382 : i32
    %154 = vector.broadcast %c382_i32_95 : i32 to vector<8x384xi32>
    %155 = arith.cmpi slt, %5, %154 : vector<8x384xi32>
    %156 = arith.select %155, %146, %153 : vector<8x384xi1>, vector<8x384xf32>
    %c2_i32_96 = arith.constant 2 : i32
    %157 = tpu.dynamic_rotate %156 by %c2_i32_96 dim 1 : vector<8x384xf32>, i32 -> vector<8x384xf32>
    %158 = tpu.concatenate %157, %146 in 0 : vector<8x384xf32>, vector<8x384xf32> -> vector<16x384xf32>
    %c4_97 = arith.constant 4 : index
    %c0_98 = arith.constant 0 : index
    %c0_99 = arith.constant 0 : index
    %159 = vector.load %arg3[%c4_97, %c0_98, %c0_99] : memref<6x8x16xf32, #tpu.memory_space<vmem>>, vector<1x8x16xf32>
    %160 = vector.shape_cast %159 : vector<1x8x16xf32> to vector<8x16xf32>
    %cst_100 = arith.constant dense<0.000000e+00> : vector<8x384xf32>
    %161 = tpu.matmul %160, %158, %cst_100 {dimension_numbers = #tpu.dot_dimension_numbers<[1], [0], [0], [1], [0, 0, 1, 1], [], []>} : vector<8x16xf32>, vector<16x384xf32>, vector<8x384xf32> -> vector<8x384xf32>
    %162 = math.tanh %161 : vector<8x384xf32>
    %163 = arith.negf %161 : vector<8x384xf32>
    %164 = math.exp %163 : vector<8x384xf32>
    %cst_101 = arith.constant 1.000000e+00 : f32
    %165 = vector.broadcast %cst_101 : f32 to vector<8x384xf32>
    %166 = arith.addf %165, %164 : vector<8x384xf32>
    %167 = arith.divf %165, %166 : vector<8x384xf32>
    %168 = arith.mulf %162, %167 : vector<8x384xf32>
    %c4_102 = arith.constant 4 : index
    %c0_103 = arith.constant 0 : index
    %c0_104 = arith.constant 0 : index
    %169 = vector.load %arg4[%c4_102, %c0_103, %c0_104] : memref<6x16x8xf32, #tpu.memory_space<vmem>>, vector<1x16x8xf32>
    %170 = vector.shape_cast %169 : vector<1x16x8xf32> to vector<16x8xf32>
    %cst_105 = arith.constant dense<0.000000e+00> : vector<16x384xf32>
    %171 = tpu.matmul %170, %168, %cst_105 {dimension_numbers = #tpu.dot_dimension_numbers<[1], [0], [0], [1], [0, 0, 1, 1], [], []>} : vector<16x8xf32>, vector<8x384xf32>, vector<16x384xf32> -> vector<16x384xf32>
    %c4_106 = arith.constant 4 : index
    %c0_107 = arith.constant 0 : index
    %c0_108 = arith.constant 0 : index
    %172 = vector.load %arg5[%c4_106, %c0_107, %c0_108] : memref<6x16x1xf32, #tpu.memory_space<vmem>>, vector<1x16x1xf32>
    %173 = vector.shape_cast %172 : vector<1x16x1xf32> to vector<16x1xf32>
    %174 = vector.broadcast %173 : vector<16x1xf32> to vector<16x384xf32>
    %175 = arith.addf %171, %174 : vector<16x384xf32>
    %176 = vector.extract_strided_slice %175 {offsets = [8, 0], sizes = [8, 384], strides = [1, 1]} : vector<16x384xf32> to vector<8x384xf32>
    %c4_109 = arith.constant 4 : index
    %c0_110 = arith.constant 0 : index
    %c0_111 = arith.constant 0 : index
    %c0_112 = arith.constant 0 : index
    %177 = vector.load %arg6[%c4_109, %c0_110, %c0_111, %c0_112] : memref<6x1x8x384xf32, #tpu.memory_space<vmem>>, vector<1x1x8x384xf32>
    %178 = vector.shape_cast %177 : vector<1x1x8x384xf32> to vector<8x384xf32>
    %179 = vector.shape_cast %176 : vector<8x384xf32> to vector<1x1x8x384xf32>
    tpu.vector_store %arg6[%c4_109, %c0_110, %c0_111, %c0_112], %179 {strides = array<i32>} : memref<6x1x8x384xf32, #tpu.memory_space<vmem>>, vector<1x1x8x384xf32>,
    %180 = vector.extract_strided_slice %175 {offsets = [0, 0], sizes = [8, 384], strides = [1, 1]} : vector<16x384xf32> to vector<8x384xf32>
    %181 = arith.addf %180, %146 : vector<8x384xf32>
    %c5 = arith.constant 5 : index
    %c0_113 = arith.constant 0 : index
    %c0_114 = arith.constant 0 : index
    %182 = vector.load %arg7[%c5, %c0_113, %c0_114] : memref<6x8x128xf32, #tpu.memory_space<vmem>>, vector<1x8x128xf32>
    %183 = vector.shape_cast %182 : vector<1x8x128xf32> to vector<8x128xf32>
    %184 = vector.extract_strided_slice %181 {offsets = [0, 256], sizes = [8, 128], strides = [1, 1]} : vector<8x384xf32> to vector<8x128xf32>
    %c5_115 = arith.constant 5 : index
    %c0_116 = arith.constant 0 : index
    %c0_117 = arith.constant 0 : index
    %185 = vector.load %arg7[%c5_115, %c0_116, %c0_117] : memref<6x8x128xf32, #tpu.memory_space<vmem>>, vector<1x8x128xf32>
    %186 = vector.shape_cast %185 : vector<1x8x128xf32> to vector<8x128xf32>
    %187 = vector.shape_cast %184 : vector<8x128xf32> to vector<1x8x128xf32>
    tpu.vector_store %arg7[%c5_115, %c0_116, %c0_117], %187 {strides = array<i32>} : memref<6x8x128xf32, #tpu.memory_space<vmem>>, vector<1x8x128xf32>,
    %188 = tpu.concatenate %6, %183 in 1 : vector<8x256xf32>, vector<8x128xf32> -> vector<8x384xf32>
    %c380_i32_118 = arith.constant 380 : i32
    %189 = vector.broadcast %c380_i32_118 : i32 to vector<8x384xi32>
    %190 = arith.cmpi slt, %5, %189 : vector<8x384xi32>
    %191 = arith.select %190, %181, %188 : vector<8x384xi1>, vector<8x384xf32>
    %c4_i32_119 = arith.constant 4 : i32
    %192 = tpu.dynamic_rotate %191 by %c4_i32_119 dim 1 : vector<8x384xf32>, i32 -> vector<8x384xf32>
    %193 = tpu.concatenate %192, %181 in 0 : vector<8x384xf32>, vector<8x384xf32> -> vector<16x384xf32>
    %c5_120 = arith.constant 5 : index
    %c0_121 = arith.constant 0 : index
    %c0_122 = arith.constant 0 : index
    %194 = vector.load %arg3[%c5_120, %c0_121, %c0_122] : memref<6x8x16xf32, #tpu.memory_space<vmem>>, vector<1x8x16xf32>
    %195 = vector.shape_cast %194 : vector<1x8x16xf32> to vector<8x16xf32>
    %cst_123 = arith.constant dense<0.000000e+00> : vector<8x384xf32>
    %196 = tpu.matmul %195, %193, %cst_123 {dimension_numbers = #tpu.dot_dimension_numbers<[1], [0], [0], [1], [0, 0, 1, 1], [], []>} : vector<8x16xf32>, vector<16x384xf32>, vector<8x384xf32> -> vector<8x384xf32>
    %197 = math.tanh %196 : vector<8x384xf32>
    %198 = arith.negf %196 : vector<8x384xf32>
    %199 = math.exp %198 : vector<8x384xf32>
    %cst_124 = arith.constant 1.000000e+00 : f32
    %200 = vector.broadcast %cst_124 : f32 to vector<8x384xf32>
    %201 = arith.addf %200, %199 : vector<8x384xf32>
    %202 = arith.divf %200, %201 : vector<8x384xf32>
    %203 = arith.mulf %197, %202 : vector<8x384xf32>
    %c5_125 = arith.constant 5 : index
    %c0_126 = arith.constant 0 : index
    %c0_127 = arith.constant 0 : index
    %204 = vector.load %arg4[%c5_125, %c0_126, %c0_127] : memref<6x16x8xf32, #tpu.memory_space<vmem>>, vector<1x16x8xf32>
    %205 = vector.shape_cast %204 : vector<1x16x8xf32> to vector<16x8xf32>
    %cst_128 = arith.constant dense<0.000000e+00> : vector<16x384xf32>
    %206 = tpu.matmul %205, %203, %cst_128 {dimension_numbers = #tpu.dot_dimension_numbers<[1], [0], [0], [1], [0, 0, 1, 1], [], []>} : vector<16x8xf32>, vector<8x384xf32>, vector<16x384xf32> -> vector<16x384xf32>
    %c5_129 = arith.constant 5 : index
    %c0_130 = arith.constant 0 : index
    %c0_131 = arith.constant 0 : index
    %207 = vector.load %arg5[%c5_129, %c0_130, %c0_131] : memref<6x16x1xf32, #tpu.memory_space<vmem>>, vector<1x16x1xf32>
    %208 = vector.shape_cast %207 : vector<1x16x1xf32> to vector<16x1xf32>
    %209 = vector.broadcast %208 : vector<16x1xf32> to vector<16x384xf32>
    %210 = arith.addf %206, %209 : vector<16x384xf32>
    %211 = vector.extract_strided_slice %210 {offsets = [8, 0], sizes = [8, 384], strides = [1, 1]} : vector<16x384xf32> to vector<8x384xf32>
    %c5_132 = arith.constant 5 : index
    %c0_133 = arith.constant 0 : index
    %c0_134 = arith.constant 0 : index
    %c0_135 = arith.constant 0 : index
    %212 = vector.load %arg6[%c5_132, %c0_133, %c0_134, %c0_135] : memref<6x1x8x384xf32, #tpu.memory_space<vmem>>, vector<1x1x8x384xf32>
    %213 = vector.shape_cast %212 : vector<1x1x8x384xf32> to vector<8x384xf32>
    %214 = vector.shape_cast %211 : vector<8x384xf32> to vector<1x1x8x384xf32>
    tpu.vector_store %arg6[%c5_132, %c0_133, %c0_134, %c0_135], %214 {strides = array<i32>} : memref<6x1x8x384xf32, #tpu.memory_space<vmem>>, vector<1x1x8x384xf32>,
    return
  }
  func.func @transform_0(%arg0: i32, %arg1: i32) -> (i32, i32, i32) {
    %c0_i32 = arith.constant 0 : i32
    %c0_i32_0 = arith.constant 0 : i32
    return %arg0, %c0_i32, %arg1 : i32, i32, i32
  }
  func.func @transform_1(%arg0: i32, %arg1: i32) -> (i32, i32, i32) {
    %c0_i32 = arith.constant 0 : i32
    %c0_i32_0 = arith.constant 0 : i32
    %c0_i32_1 = arith.constant 0 : i32
    %c0_i32_2 = arith.constant 0 : i32
    return %c0_i32, %c0_i32_0, %c0_i32_1 : i32, i32, i32
  }
  func.func @transform_2(%arg0: i32, %arg1: i32) -> (i32, i32, i32) {
    %c0_i32 = arith.constant 0 : i32
    %c0_i32_0 = arith.constant 0 : i32
    %c0_i32_1 = arith.constant 0 : i32
    %c0_i32_2 = arith.constant 0 : i32
    return %c0_i32, %c0_i32_0, %c0_i32_1 : i32, i32, i32
  }
  func.func @transform_3(%arg0: i32, %arg1: i32) -> (i32, i32, i32) {
    %c0_i32 = arith.constant 0 : i32
    %c0_i32_0 = arith.constant 0 : i32
    %c0_i32_1 = arith.constant 0 : i32
    %c0_i32_2 = arith.constant 0 : i32
    return %c0_i32, %c0_i32_0, %c0_i32_1 : i32, i32, i32
  }
  func.func @transform_4(%arg0: i32, %arg1: i32) -> (i32, i32, i32, i32) {
    %c0_i32 = arith.constant 0 : i32
    %c0_i32_0 = arith.constant 0 : i32
    %c0_i32_1 = arith.constant 0 : i32
    return %c0_i32, %arg0, %c0_i32_0, %arg1 : i32, i32, i32, i32
  }
}

</mosaic_0001>

<llo_original>
// kernel: tpu_custom_call.1
$region0: #{tpu_custom_call.1}
  #allocation0 [shape = 'u32[]', space=smem, size = 0x4, offset = 0x4, fixed_abs, tag = 'smem constant byte address 0x4 - core index']
  #allocation1 [shape = 'u32[72,128]{1,0:T(1,128)}', space=vmem, size = 0x9000, scoped, tag = 'internal scratch']
  #allocation2 [shape = 'f32[6,8,128]{2,1,0:T(8,128)}', space=vmem, size = 0x6000, scoped, tag = 'scratch operand']
  %s0 = inlined_call_operand.vmem [shape: f32[2,8,384], index: 0, kind: input, shape index: {}]
  %s1 = inlined_call_operand.vmem [shape: f32[6,8,16], index: 1, kind: input, shape index: {}]
  %s2 = inlined_call_operand.vmem [shape: f32[6,16,8], index: 2, kind: input, shape index: {}]
  %s3 = inlined_call_operand.vmem [shape: f32[6,16,1], index: 3, kind: input, shape index: {}]
  %s4 = inlined_call_operand.hbm [shape: f32[6,2,8,384], index: 4, kind: output, shape index: {}]
  %s5 = sld [smem:[#allocation0]]
  $region53: #{tpu_custom_call.1} parent=0
    _
  %s7 = ssub.s32 1, %s5
  %s8 = scalar_select 0, %s7, %s5
  $region1: #{tpu_custom_call.1} parent=0
    #allocation3 [shape = 'u8[147456]{0}', space=vmem, size = 0x24000, scoped, tag = 'output window, operand 0']
    #allocation4 [shape = 's32[2]{0}', space=sflag, size = 0x8, scoped, tag = 'scoped memory for tpu_custom_call.1']
    %9 = vsyncpa [#allocation4], 0
    %s10 = scalar_lea.sflag [#allocation4], 1
    %11 = vsyncpa %s10, 0
    loop: start=0, step=1, limit=4
    $region2: #{tpu_custom_call.1} parent=1 // loop_pre_header
      _
    $region3: #{tpu_custom_call.1} parent=1 // loop_header
      %s13 = sphi 0, %s17
      %p14 = scmp.ge.s32.totalorder %s13, 4
      %s20 = sphi 0, %s32
      %s21 = sphi 0, %s28
      %s22 = sphi 0, %s20
      %s23 = sphi 0, %s21
      %s24 = sphi 0, %s22
      %s25 = sphi 0, %s23
      %s37 = sphi 0, %s39
      %s40 = sphi 0, %s37
      %s41 = sphi 0, %s40
      %s57 = sphi 0, %s41
      %s61 = sphi 0, %s61
      %s63 = sphi 0, %s61
      %s64 = sphi 0, %s63
      %s78 = sphi 0, %s64
      %s82 = sphi 0, %s82
      %s84 = sphi 0, %s82
      %s85 = sphi 0, %s84
      %s99 = sphi 0, %s85
      %s103 = sphi 0, %s103
      %s105 = sphi 0, %s103
      %s106 = sphi 0, %s105
      %s120 = sphi 0, %s106
      %s128 = sphi 0, %s130
      %s131 = sphi 0, %s128
      %s132 = sphi 0, %s131
      %s148 = sphi 0, %s132
    $region4: #{tpu_custom_call.1} parent=1 // loop_header_branch
      %16 = sbr.rel (%p14) target = $region8
    $region5: #{tpu_custom_call.1} parent=1 // loop_body
      %s18 = ssub.s32 %s13, 1
      %s19 = ssub.s32 %s13, 2
      %s26 = sadd.s32 1, %s21
      %p27 = scmp.ge.s32.totalorder %s26, 1
      %s28 = scalar_select %p27, 0, %s26
      %s29 = sadd.s32 1, %s20
      %s30 = scalar_select %p27, %s29, %s20
      %p31 = scmp.ge.s32.totalorder %s30, 2
      %s32 = scalar_select %p31, 0, %s30
      %s33 = ssub.s32 %s20, %s32
      %s34 = ssub.s32 %s21, %s28
      %s35 = sor.u32 %s33, %s34
      %p36 = scmp.eq.s32.totalorder %s35, 0
      %s38 = sadd.s32 %s37, 1
      %s39 = scalar_select %p36, %s37, %s38
      %p42 = pneg %p36
      %p43 = scmp.eq.s32.totalorder %s13, 1
      %p44 = por %p42, %p43
      %p45 = scmp.ne.s32.totalorder %s37, %s40
      %p46 = scmp.eq.s32.totalorder %s13, 0
      %p47 = por %p45, %p46
      %p48 = scmp.ne.s32.totalorder %s37, %s40
      %p49 = scmp.eq.s32.totalorder %s18, 1
      %p50 = por %p48, %p49
      %p51 = scmp.ne.s32.totalorder %s40, %s41
      %p52 = scmp.eq.s32.totalorder %s18, 0
      %p53 = por %p51, %p52
      %p54 = scmp.ne.s32.totalorder %s40, %s41
      %p55 = scmp.eq.s32.totalorder %s19, 1
      %p56 = por %p54, %p55
      %p58 = scmp.ne.s32.totalorder %s41, %s57
      %p59 = scmp.eq.s32.totalorder %s19, 0
      %p60 = por %p58, %p59
      %s62 = sadd.s32 %s61, 1
      %p65 = scmp.eq.s32.totalorder %s13, 1
      %p66 = scmp.ne.s32.totalorder %s61, %s63
      %p67 = scmp.eq.s32.totalorder %s13, 0
      %p68 = por %p66, %p67
      %p69 = scmp.ne.s32.totalorder %s61, %s63
      %p70 = scmp.eq.s32.totalorder %s18, 1
      %p71 = por %p69, %p70
      %p72 = scmp.ne.s32.totalorder %s63, %s64
      %p73 = scmp.eq.s32.totalorder %s18, 0
      %p74 = por %p72, %p73
      %p75 = scmp.ne.s32.totalorder %s63, %s64
      %p76 = scmp.eq.s32.totalorder %s19, 1
      %p77 = por %p75, %p76
      %p79 = scmp.ne.s32.totalorder %s64, %s78
      %p80 = scmp.eq.s32.totalorder %s19, 0
      %p81 = por %p79, %p80
      %s83 = sadd.s32 %s82, 1
      %p86 = scmp.eq.s32.totalorder %s13, 1
      %p87 = scmp.ne.s32.totalorder %s82, %s84
      %p88 = scmp.eq.s32.totalorder %s13, 0
      %p89 = por %p87, %p88
      %p90 = scmp.ne.s32.totalorder %s82, %s84
      %p91 = scmp.eq.s32.totalorder %s18, 1
      %p92 = por %p90, %p91
      %p93 = scmp.ne.s32.totalorder %s84, %s85
      %p94 = scmp.eq.s32.totalorder %s18, 0
      %p95 = por %p93, %p94
      %p96 = scmp.ne.s32.totalorder %s84, %s85
      %p97 = scmp.eq.s32.totalorder %s19, 1
      %p98 = por %p96, %p97
      %p100 = scmp.ne.s32.totalorder %s85, %s99
      %p101 = scmp.eq.s32.totalorder %s19, 0
      %p102 = por %p100, %p101
      %s104 = sadd.s32 %s103, 1
      %p107 = scmp.eq.s32.totalorder %s13, 1
      %p108 = scmp.ne.s32.totalorder %s103, %s105
      %p109 = scmp.eq.s32.totalorder %s13, 0
      %p110 = por %p108, %p109
      %p111 = scmp.ne.s32.totalorder %s103, %s105
      %p112 = scmp.eq.s32.totalorder %s18, 1
      %p113 = por %p111, %p112
      %p114 = scmp.ne.s32.totalorder %s105, %s106
      %p115 = scmp.eq.s32.totalorder %s18, 0
      %p116 = por %p114, %p115
      %p117 = scmp.ne.s32.totalorder %s105, %s106
      %p118 = scmp.eq.s32.totalorder %s19, 1
      %p119 = por %p117, %p118
      %p121 = scmp.ne.s32.totalorder %s106, %s120
      %p122 = scmp.eq.s32.totalorder %s19, 0
      %p123 = por %p121, %p122
      %s124 = ssub.s32 %s20, %s32
      %s125 = ssub.s32 %s21, %s28
      %s126 = sor.u32 %s124, %s125
      %p127 = scmp.eq.s32.totalorder %s126, 0
      %s129 = sadd.s32 %s128, 1
      %s130 = scalar_select %p127, %s128, %s129
      %p133 = pneg %p127
      %p134 = scmp.eq.s32.totalorder %s13, 1
      %p135 = por %p133, %p134
      %p136 = scmp.ne.s32.totalorder %s128, %s131
      %p137 = scmp.eq.s32.totalorder %s13, 0
      %p138 = por %p136, %p137
      %p139 = scmp.ne.s32.totalorder %s128, %s131
      %p140 = scmp.eq.s32.totalorder %s18, 1
      %p141 = por %p139, %p140
      %p142 = scmp.ne.s32.totalorder %s131, %s132
      %p143 = scmp.eq.s32.totalorder %s18, 0
      %p144 = por %p142, %p143
      %p145 = scmp.ne.s32.totalorder %s131, %s132
      %p146 = scmp.eq.s32.totalorder %s19, 1
      %p147 = por %p145, %p146
      %p149 = scmp.ne.s32.totalorder %s132, %s148
      %p150 = scmp.eq.s32.totalorder %s19, 0
      %p151 = por %p149, %p150
      %p152 = scmp.le.s32.totalorder 1, %s13
      %p153 = scmp.lt.s32.totalorder %s13, 3
      %p154 = pnand %p152, %p153
      %p155 = pneg %p154
      // Predicated region
      $region9: #{tpu_custom_call.1} parent=5 // pred_check
        _
      $region10: #{tpu_custom_call.1} parent=5 // pred_check_branch
        %157 = sbr.rel (%p154) target = $region12
      $region11: #{tpu_custom_call.1} parent=5 // pred_region
        %s158 = ssub.s32 %s13, 1
        // Predicated region
        $region13: #{tpu_custom_call.1} parent=11 // pred_check
          %p159 = pneg %p74
        $region14: #{tpu_custom_call.1} parent=11 // pred_check_branch
          %161 = sbr.rel (%p159) target = $region16
        $region15: #{tpu_custom_call.1} parent=11 // pred_region
          _
        $region16: #{tpu_custom_call.1} parent=11 // pred_fallthru
          _
        // Predicated region
        $region17: #{tpu_custom_call.1} parent=11 // pred_check
          %p162 = pneg %p95
        $region18: #{tpu_custom_call.1} parent=11 // pred_check_branch
          %164 = sbr.rel (%p162) target = $region20
        $region19: #{tpu_custom_call.1} parent=11 // pred_region
          _
        $region20: #{tpu_custom_call.1} parent=11 // pred_fallthru
          _
        // Predicated region
        $region21: #{tpu_custom_call.1} parent=11 // pred_check
          %p165 = pneg %p116
        $region22: #{tpu_custom_call.1} parent=11 // pred_check_branch
          %167 = sbr.rel (%p165) target = $region24
        $region23: #{tpu_custom_call.1} parent=11 // pred_region
          _
        $region24: #{tpu_custom_call.1} parent=11 // pred_fallthru
          _
      $region12: #{tpu_custom_call.1} parent=5 // pred_fallthru
        _
      %p168 = scmp.lt.s32.totalorder %s13, 2
      // Predicated region
      $region25: #{tpu_custom_call.1} parent=5 // pred_check
        %p169 = pneg %p168
      $region26: #{tpu_custom_call.1} parent=5 // pred_check_branch
        %171 = sbr.rel (%p169) target = $region28
      $region27: #{tpu_custom_call.1} parent=5 // pred_region
        // Predicated region
        $region29: #{tpu_custom_call.1} parent=27 // pred_check
          %p172 = pneg %p47
        $region30: #{tpu_custom_call.1} parent=27 // pred_check_branch
          %174 = sbr.rel (%p172) target = $region32
        $region31: #{tpu_custom_call.1} parent=27 // pred_region
          %s175 = smul.u32 3, %s21
          %p176 = scmp.lt.s32.totalorder %s20, 1
          %s177 = scalar_select %p176, %s20, 1
          %p178 = scmp.lt.s32.totalorder %s175, 2
          %s179 = scalar_select %p178, %s175, 2
          %s180 = smul.addr %s177, 3
          %s181 = sadd.s32 %s179, %s180
          %s182 = smul.addr %s181, 8
          %s183 = scalar_lea.vmem %s0, %s182
          %s184 = smul.u32 3, %s21
        $region32: #{tpu_custom_call.1} parent=27 // pred_fallthru
          _
      $region28: #{tpu_custom_call.1} parent=5 // pred_fallthru
        _
      %p185 = scmp.le.s32.totalorder 1, %s13
      %p186 = scmp.lt.s32.totalorder %s13, 3
      %p187 = pnand %p185, %p186
      %p188 = pneg %p187
      // Predicated region
      $region33: #{tpu_custom_call.1} parent=5 // pred_check
        _
      $region34: #{tpu_custom_call.1} parent=5 // pred_check_branch
        %190 = sbr.rel (%p187) target = $region36
      $region35: #{tpu_custom_call.1} parent=5 // pred_region
        %s191 = ssub.s32 %s13, 1
        %s192 = smul.u32 3, %s23
        %p193 = scmp.lt.s32.totalorder %s22, 1
        %s194 = scalar_select %p193, %s22, 1
        %p195 = scmp.lt.s32.totalorder %s192, 2
        %s196 = scalar_select %p195, %s192, 2
        %s197 = smul.addr %s194, 3
        %s198 = sadd.s32 %s196, %s197
        %s199 = smul.addr %s198, 8
        %s200 = scalar_lea.vmem %s0, %s199
        %p201 = pneg %p53
        %p202 = pneg %p50
        %p203 = pneg %p74
        %p204 = pneg %p71
        %p205 = pneg %p95
        %p206 = pneg %p92
        %p207 = pneg %p116
        %p208 = pneg %p113
        %p209 = pneg %p144
        %p210 = pneg %p141
        %s211 = sand.u32 %s131, 1
        %s212 = scalar_lea.sflag [#allocation4], %s211
        %s213 = sand.u32 %s131, 1
        %s214 = smul.addr %s213, 144
        %s215 = scalar_lea.vmem [#allocation3], %s214
        %s216 = smul.u32 3, %s23
        %p217 = scmp.lt.s32.totalorder %s22, 1
        %s218 = scalar_select %p217, %s22, 1
        %p219 = scmp.lt.s32.totalorder %s216, 2
        %s220 = scalar_select %p219, %s216, 2
        %s221 = smul.addr %s218, 3
        %s222 = sadd.s32 %s220, %s221
        %s223 = smul.addr %s222, 8
        %s224 = scalar_lea.vmem %s0, %s223
        %s225 = smul.u32 3, %s23
        %s226 = smul.u32 3, %s23
        %p227 = scmp.eq.s32.totalorder %s23, 0
        // Predicated region
        $region37: #{tpu_custom_call.1} parent=35 // pred_check
          %p228 = pneg %p227
        $region38: #{tpu_custom_call.1} parent=35 // pred_check_branch
          %230 = sbr.rel (%p228) target = $region40
        $region39: #{tpu_custom_call.1} parent=35 // pred_region
          %231 = vst [vmem:[#allocation2] sm:$0xff] 0.0
          %232 = vst [vmem:[#allocation2 + $0x8] sm:$0xff] 0.0
          %233 = vst [vmem:[#allocation2 + $0x10] sm:$0xff] 0.0
          %234 = vst [vmem:[#allocation2 + $0x18] sm:$0xff] 0.0
          %235 = vst [vmem:[#allocation2 + $0x20] sm:$0xff] 0.0
          %236 = vst [vmem:[#allocation2 + $0x28] sm:$0xff] 0.0
        $region40: #{tpu_custom_call.1} parent=35 // pred_fallthru
          _
        %v237 = vld [vmem:[%s224] sm:$0xff]
        %v238 = vld [vmem:[%s224 + $0x8] sm:$0xff]
        %v239 = vld [vmem:[%s224 + $0x10] sm:$0xff]
        %v240 = vlaneseq
        %v241 = vand.u32 %v240, 127
        %v242 = vadd.s32 %v241, 128
        %v243 = vadd.s32 %v241, 256
        %v244 = vld [vmem:[#allocation2] sm:$0xff]
        %245 = vst [vmem:[#allocation2] sm:$0xff] %v239
        %vm246 = vcmp.lt.s32.totalorder %v241, 383
        %vm247 = vcmp.lt.s32.totalorder %v242, 383
        %vm248 = vcmp.lt.s32.totalorder %v243, 383
        %v249 = vsel %vm246, %v237, 0.0
        %v250 = vsel %vm247, %v238, 0.0
        %v251 = vsel %vm248, %v239, %v244
        %252 = vrot.lane.b32.xlu0 %v249, 1
        %v253 = vpop.permute.xlu0 %252
        %254 = vrot.lane.b32.xlu0 %v250, 1
        %v255 = vpop.permute.xlu0 %254
        %256 = vrot.lane.b32.xlu0 %v251, 1
        %v257 = vpop.permute.xlu0 %256
        %vm258 = vcmp.lt.s32.totalorder %v241, 1
        %v259 = vsel %vm258, %v255, %v257
        %v260 = vsel %vm258, %v253, %v255
        %v261 = vsel %vm258, %v257, %v253
        %v262 = vld [vmem:[%s1] sm:$0xff]
        %vm263 = vcmask 130048
        %v265 = vsel %vm263, %v262, 0
        %267 = vmatpush.msra.mxu0 0.0
        %268 = vmatpush.msra.mxu0 0.0
        %269 = vmatpush.msra.mxu0 0.0
        %270 = vmatpush.msra.mxu0 0.0
        %271 = vmatpush.msra.mxu0 0.0
        %272 = vmatpush.msra.mxu0 0.0
        %273 = vmatpush.msra.mxu0 0.0
        %274 = vmatpush.msra.mxu0 0.0
        %275 = vmatpush.msra.mxu0 0.0
        %276 = vmatpush.msra.mxu0 0.0
        %277 = vmatpush.msra.mxu0 0.0
        %278 = vmatpush.msra.mxu0 0.0
        %279 = vmatpush.msra.mxu0 0.0
        %280 = vmatpush.msra.mxu0 0.0
        %281 = vmatpush.msra.mxu0 %v237
        %282 = vmatpush.msra.mxu0 %v261
        %283 = vmatmul.f32.gmra.mxu0 %v265
        %v284 = vpop.f32.mrf.mxu0
        %v285 = vadd.f32 0.0, %v284
        %286 = vdwg.mxu0
        %287 = vmatpush.msra.mxu0 0.0
        %288 = vmatpush.msra.mxu0 0.0
        %289 = vmatpush.msra.mxu0 0.0
        %290 = vmatpush.msra.mxu0 0.0
        %291 = vmatpush.msra.mxu0 0.0
        %292 = vmatpush.msra.mxu0 0.0
        %293 = vmatpush.msra.mxu0 0.0
        %294 = vmatpush.msra.mxu0 0.0
        %295 = vmatpush.msra.mxu0 0.0
        %296 = vmatpush.msra.mxu0 0.0
        %297 = vmatpush.msra.mxu0 0.0
        %298 = vmatpush.msra.mxu0 0.0
        %299 = vmatpush.msra.mxu0 0.0
        %300 = vmatpush.msra.mxu0 0.0
        %301 = vmatpush.msra.mxu0 %v238
        %302 = vmatpush.msra.mxu0 %v260
        %303 = vmatmul.f32.gmra.mxu0 %v265
        %v304 = vpop.f32.mrf.mxu0
        %v305 = vadd.f32 0.0, %v304
        %306 = vdwg.mxu0
        %307 = vmatpush.msra.mxu0 0.0
        %308 = vmatpush.msra.mxu0 0.0
        %309 = vmatpush.msra.mxu0 0.0
        %310 = vmatpush.msra.mxu0 0.0
        %311 = vmatpush.msra.mxu0 0.0
        %312 = vmatpush.msra.mxu0 0.0
        %313 = vmatpush.msra.mxu0 0.0
        %314 = vmatpush.msra.mxu0 0.0
        %315 = vmatpush.msra.mxu0 0.0
        %316 = vmatpush.msra.mxu0 0.0
        %317 = vmatpush.msra.mxu0 0.0
        %318 = vmatpush.msra.mxu0 0.0
        %319 = vmatpush.msra.mxu0 0.0
        %320 = vmatpush.msra.mxu0 0.0
        %321 = vmatpush.msra.mxu0 %v239
        %322 = vmatpush.msra.mxu0 %v259
        %323 = vmatmul.f32.gmra.mxu0 %v265
        %v324 = vpop.f32.mrf.mxu0
        %v325 = vadd.f32 0.0, %v324
        %326 = vdwg.mxu0
        %v327 = vtanh.pop %v285
        %v328 = vtanh.pop %v305
        %v329 = vtanh.pop %v325
        %v330 = vxor.u32 %v285, 2147483648
        %v331 = vxor.u32 %v305, 2147483648
        %v332 = vxor.u32 %v325, 2147483648
        %v333 = vmul.f32 %v330, 1.442695
        %v334 = vpow.pop %v333
        %v335 = vmul.f32 %v331, 1.442695
        %v336 = vpow.pop %v335
        %v337 = vmul.f32 %v332, 1.442695
        %v338 = vpow.pop %v337
        %v339 = vadd.f32 %v334, 1.0
        %v340 = vadd.f32 %v336, 1.0
        %v341 = vadd.f32 %v338, 1.0
        %v342 = vrcp.pop %v339
        %v343 = vmul.f32 %v339, %v342
        %v344 = vsub.f32 1.0, %v343
        %v345 = vmul.f32 %v342, %v344
        %v346 = vadd.f32 %v342, %v345
        %vm347 = vweird.f32 %v339
        %vm348 = vweird.f32 %v342
        %vm349 = vmor %vm347, %vm348
        %v350 = vsel %vm349, %v342, %v346
        %v351 = vand.u32 2147483647, %v339
        %vm352 = vcmp.eq.f32.partialorder %v351, 8.507059e+37
        %v353 = vand.u32 %v339, 2147483648
        %v354 = vor.u32 1.1754944e-38, %v353
        %v355 = vsel %vm352, %v354, %v350
        %v356 = vmul.f32 1.0, %v355
        %v357 = vrcp.pop %v340
        %v358 = vmul.f32 %v340, %v357
        %v359 = vsub.f32 1.0, %v358
        %v360 = vmul.f32 %v357, %v359
        %v361 = vadd.f32 %v357, %v360
        %vm362 = vweird.f32 %v340
        %vm363 = vweird.f32 %v357
        %vm364 = vmor %vm362, %vm363
        %v365 = vsel %vm364, %v357, %v361
        %v366 = vand.u32 2147483647, %v340
        %vm367 = vcmp.eq.f32.partialorder %v366, 8.507059e+37
        %v368 = vand.u32 %v340, 2147483648
        %v369 = vor.u32 1.1754944e-38, %v368
        %v370 = vsel %vm367, %v369, %v365
        %v371 = vmul.f32 1.0, %v370
        %v372 = vrcp.pop %v341
        %v373 = vmul.f32 %v341, %v372
        %v374 = vsub.f32 1.0, %v373
        %v375 = vmul.f32 %v372, %v374
        %v376 = vadd.f32 %v372, %v375
        %vm377 = vweird.f32 %v341
        %vm378 = vweird.f32 %v372
        %vm379 = vmor %vm377, %vm378
        %v380 = vsel %vm379, %v372, %v376
        %v381 = vand.u32 2147483647, %v341
        %vm382 = vcmp.eq.f32.partialorder %v381, 8.507059e+37
        %v383 = vand.u32 %v341, 2147483648
        %v384 = vor.u32 1.1754944e-38, %v383
        %v385 = vsel %vm382, %v384, %v380
        %v386 = vmul.f32 1.0, %v385
        %v387 = vmul.f32 %v327, %v356
        %v388 = vmul.f32 %v328, %v371
        %v389 = vmul.f32 %v329, %v386
        %v390 = vld [vmem:[%s2] sm:$0xff]
        %v391 = vld [vmem:[%s2 + $0x8] sm:$0xff]
        %v392 = vld [vmem:[%s3] sm:$0xff]
        %v393 = vld [vmem:[%s3 + $0x8] sm:$0xff]
        %395 = vset.pattern.permute.xlu0 0
        %396 = vperm.xlu0 %395, %v392
        %v397 = vpop.permute.xlu0 %396
        %400 = vset.pattern.permute.xlu0 0
        %401 = vperm.xlu0 %400, %v393
        %v402 = vpop.permute.xlu0 %401
        %vm404 = vcmask 64512
        %v406 = vsel %vm404, %v390, 0
        %v409 = vsel %vm404, %v391, 0
        %411 = vmatpush.msra.mxu0 0.0
        %412 = vmatpush.msra.mxu0 0.0
        %413 = vmatpush.msra.mxu0 0.0
        %414 = vmatpush.msra.mxu0 0.0
        %415 = vmatpush.msra.mxu0 0.0
        %416 = vmatpush.msra.mxu0 0.0
        %417 = vmatpush.msra.mxu0 0.0
        %418 = vmatpush.msra.mxu0 0.0
        %419 = vmatpush.msra.mxu0 0.0
        %420 = vmatpush.msra.mxu0 0.0
        %421 = vmatpush.msra.mxu0 0.0
        %422 = vmatpush.msra.mxu0 0.0
        %423 = vmatpush.msra.mxu0 0.0
        %424 = vmatpush.msra.mxu0 0.0
        %425 = vmatpush.msra.mxu0 0.0
        %426 = vmatpush.msra.mxu0 %v387
        %427 = vmatmul.f32.gmra.mxu0 %v406
        %v428 = vpop.f32.mrf.mxu0
        %v429 = vadd.f32 %v397, %v428
        %430 = vmatmul.f32.gmra.mxu0 %v409
        %v431 = vpop.f32.mrf.mxu0
        %v432 = vadd.f32 %v402, %v431
        %433 = vdwg.mxu0
        %434 = vmatpush.msra.mxu0 0.0
        %435 = vmatpush.msra.mxu0 0.0
        %436 = vmatpush.msra.mxu0 0.0
        %437 = vmatpush.msra.mxu0 0.0
        %438 = vmatpush.msra.mxu0 0.0
        %439 = vmatpush.msra.mxu0 0.0
        %440 = vmatpush.msra.mxu0 0.0
        %441 = vmatpush.msra.mxu0 0.0
        %442 = vmatpush.msra.mxu0 0.0
        %443 = vmatpush.msra.mxu0 0.0
        %444 = vmatpush.msra.mxu0 0.0
        %445 = vmatpush.msra.mxu0 0.0
        %446 = vmatpush.msra.mxu0 0.0
        %447 = vmatpush.msra.mxu0 0.0
        %448 = vmatpush.msra.mxu0 0.0
        %449 = vmatpush.msra.mxu0 %v388
        %450 = vmatmul.f32.gmra.mxu0 %v406
        %v451 = vpop.f32.mrf.mxu0
        %v452 = vadd.f32 %v397, %v451
        %453 = vmatmul.f32.gmra.mxu0 %v409
        %v454 = vpop.f32.mrf.mxu0
        %v455 = vadd.f32 %v402, %v454
        %456 = vdwg.mxu0
        %457 = vmatpush.msra.mxu0 0.0
        %458 = vmatpush.msra.mxu0 0.0
        %459 = vmatpush.msra.mxu0 0.0
        %460 = vmatpush.msra.mxu0 0.0
        %461 = vmatpush.msra.mxu0 0.0
        %462 = vmatpush.msra.mxu0 0.0
        %463 = vmatpush.msra.mxu0 0.0
        %464 = vmatpush.msra.mxu0 0.0
        %465 = vmatpush.msra.mxu0 0.0
        %466 = vmatpush.msra.mxu0 0.0
        %467 = vmatpush.msra.mxu0 0.0
        %468 = vmatpush.msra.mxu0 0.0
        %469 = vmatpush.msra.mxu0 0.0
        %470 = vmatpush.msra.mxu0 0.0
        %471 = vmatpush.msra.mxu0 0.0
        %472 = vmatpush.msra.mxu0 %v389
        %473 = vmatmul.f32.gmra.mxu0 %v406
        %v474 = vpop.f32.mrf.mxu0
        %v475 = vadd.f32 %v397, %v474
        %476 = vmatmul.f32.gmra.mxu0 %v409
        %v477 = vpop.f32.mrf.mxu0
        %v478 = vadd.f32 %v402, %v477
        %479 = vdwg.mxu0
        %480 = vst [vmem:[%s215] sm:$0xff] %v432
        %481 = vst [vmem:[%s215 + $0x8] sm:$0xff] %v455
        %482 = vst [vmem:[%s215 + $0x10] sm:$0xff] %v478
        %v483 = vadd.f32 %v429, %v237
        %v484 = vadd.f32 %v452, %v238
        %v485 = vadd.f32 %v475, %v239
        %s486 = scalar_lea.vmem [#allocation2], 8
        %v487 = vld [vmem:[%s486] sm:$0xff]
        %488 = vst [vmem:[%s486] sm:$0xff] %v485
        %vm489 = vcmp.lt.s32.totalorder %v241, 382
        %vm490 = vcmp.lt.s32.totalorder %v242, 382
        %vm491 = vcmp.lt.s32.totalorder %v243, 382
        %v492 = vsel %vm489, %v483, 0.0
        %v493 = vsel %vm490, %v484, 0.0
        %v494 = vsel %vm491, %v485, %v487
        %495 = vrot.lane.b32.xlu0 %v492, 2
        %v496 = vpop.permute.xlu0 %495
        %497 = vrot.lane.b32.xlu0 %v493, 2
        %v498 = vpop.permute.xlu0 %497
        %499 = vrot.lane.b32.xlu0 %v494, 2
        %v500 = vpop.permute.xlu0 %499
        %vm501 = vcmp.lt.s32.totalorder %v241, 2
        %v502 = vsel %vm501, %v498, %v500
        %v503 = vsel %vm501, %v496, %v498
        %v504 = vsel %vm501, %v500, %v496
        %s505 = scalar_lea.vmem %s1, 8
        %v506 = vld [vmem:[%s505] sm:$0xff]
        %v508 = vsel %vm263, %v506, 0
        %510 = vmatpush.msra.mxu0 0.0
        %511 = vmatpush.msra.mxu0 0.0
        %512 = vmatpush.msra.mxu0 0.0
        %513 = vmatpush.msra.mxu0 0.0
        %514 = vmatpush.msra.mxu0 0.0
        %515 = vmatpush.msra.mxu0 0.0
        %516 = vmatpush.msra.mxu0 0.0
        %517 = vmatpush.msra.mxu0 0.0
        %518 = vmatpush.msra.mxu0 0.0
        %519 = vmatpush.msra.mxu0 0.0
        %520 = vmatpush.msra.mxu0 0.0
        %521 = vmatpush.msra.mxu0 0.0
        %522 = vmatpush.msra.mxu0 0.0
        %523 = vmatpush.msra.mxu0 0.0
        %524 = vmatpush.msra.mxu0 %v483
        %525 = vmatpush.msra.mxu0 %v504
        %526 = vmatmul.f32.gmra.mxu0 %v508
        %v527 = vpop.f32.mrf.mxu0
        %v528 = vadd.f32 0.0, %v527
        %529 = vdwg.mxu0
        %530 = vmatpush.msra.mxu0 0.0
        %531 = vmatpush.msra.mxu0 0.0
        %532 = vmatpush.msra.mxu0 0.0
        %533 = vmatpush.msra.mxu0 0.0
        %534 = vmatpush.msra.mxu0 0.0
        %535 = vmatpush.msra.mxu0 0.0
        %536 = vmatpush.msra.mxu0 0.0
        %537 = vmatpush.msra.mxu0 0.0
        %538 = vmatpush.msra.mxu0 0.0
        %539 = vmatpush.msra.mxu0 0.0
        %540 = vmatpush.msra.mxu0 0.0
        %541 = vmatpush.msra.mxu0 0.0
        %542 = vmatpush.msra.mxu0 0.0
        %543 = vmatpush.msra.mxu0 0.0
        %544 = vmatpush.msra.mxu0 %v484
        %545 = vmatpush.msra.mxu0 %v503
        %546 = vmatmul.f32.gmra.mxu0 %v508
        %v547 = vpop.f32.mrf.mxu0
        %v548 = vadd.f32 0.0, %v547
        %549 = vdwg.mxu0
        %550 = vmatpush.msra.mxu0 0.0
        %551 = vmatpush.msra.mxu0 0.0
        %552 = vmatpush.msra.mxu0 0.0
        %553 = vmatpush.msra.mxu0 0.0
        %554 = vmatpush.msra.mxu0 0.0
        %555 = vmatpush.msra.mxu0 0.0
        %556 = vmatpush.msra.mxu0 0.0
        %557 = vmatpush.msra.mxu0 0.0
        %558 = vmatpush.msra.mxu0 0.0
        %559 = vmatpush.msra.mxu0 0.0
        %560 = vmatpush.msra.mxu0 0.0
        %561 = vmatpush.msra.mxu0 0.0
        %562 = vmatpush.msra.mxu0 0.0
        %563 = vmatpush.msra.mxu0 0.0
        %564 = vmatpush.msra.mxu0 %v485
        %565 = vmatpush.msra.mxu0 %v502
        %566 = vmatmul.f32.gmra.mxu0 %v508
        %v567 = vpop.f32.mrf.mxu0
        %v568 = vadd.f32 0.0, %v567
        %569 = vdwg.mxu0
        %v570 = vtanh.pop %v528
        %v571 = vtanh.pop %v548
        %v572 = vtanh.pop %v568
        %v573 = vxor.u32 %v528, 2147483648
        %v574 = vxor.u32 %v548, 2147483648
        %v575 = vxor.u32 %v568, 2147483648
        %v576 = vmul.f32 %v573, 1.442695
        %v577 = vpow.pop %v576
        %v578 = vmul.f32 %v574, 1.442695
        %v579 = vpow.pop %v578
        %v580 = vmul.f32 %v575, 1.442695
        %v581 = vpow.pop %v580
        %v582 = vadd.f32 %v577, 1.0
        %v583 = vadd.f32 %v579, 1.0
        %v584 = vadd.f32 %v581, 1.0
        %v585 = vrcp.pop %v582
        %v586 = vmul.f32 %v582, %v585
        %v587 = vsub.f32 1.0, %v586
        %v588 = vmul.f32 %v585, %v587
        %v589 = vadd.f32 %v585, %v588
        %vm590 = vweird.f32 %v582
        %vm591 = vweird.f32 %v585
        %vm592 = vmor %vm590, %vm591
        %v593 = vsel %vm592, %v585, %v589
        %v594 = vand.u32 2147483647, %v582
        %vm595 = vcmp.eq.f32.partialorder %v594, 8.507059e+37
        %v596 = vand.u32 %v582, 2147483648
        %v597 = vor.u32 1.1754944e-38, %v596
        %v598 = vsel %vm595, %v597, %v593
        %v599 = vmul.f32 1.0, %v598
        %v600 = vrcp.pop %v583
        %v601 = vmul.f32 %v583, %v600
        %v602 = vsub.f32 1.0, %v601
        %v603 = vmul.f32 %v600, %v602
        %v604 = vadd.f32 %v600, %v603
        %vm605 = vweird.f32 %v583
        %vm606 = vweird.f32 %v600
        %vm607 = vmor %vm605, %vm606
        %v608 = vsel %vm607, %v600, %v604
        %v609 = vand.u32 2147483647, %v583
        %vm610 = vcmp.eq.f32.partialorder %v609, 8.507059e+37
        %v611 = vand.u32 %v583, 2147483648
        %v612 = vor.u32 1.1754944e-38, %v611
        %v613 = vsel %vm610, %v612, %v608
        %v614 = vmul.f32 1.0, %v613
        %v615 = vrcp.pop %v584
        %v616 = vmul.f32 %v584, %v615
        %v617 = vsub.f32 1.0, %v616
        %v618 = vmul.f32 %v615, %v617
        %v619 = vadd.f32 %v615, %v618
        %vm620 = vweird.f32 %v584
        %vm621 = vweird.f32 %v615
        %vm622 = vmor %vm620, %vm621
        %v623 = vsel %vm622, %v615, %v619
        %v624 = vand.u32 2147483647, %v584
        %vm625 = vcmp.eq.f32.partialorder %v624, 8.507059e+37
        %v626 = vand.u32 %v584, 2147483648
        %v627 = vor.u32 1.1754944e-38, %v626
        %v628 = vsel %vm625, %v627, %v623
        %v629 = vmul.f32 1.0, %v628
        %v630 = vmul.f32 %v570, %v599
        %v631 = vmul.f32 %v571, %v614
        %v632 = vmul.f32 %v572, %v629
        %s633 = scalar_lea.vmem %s2, 16
        %v634 = vld [vmem:[%s633] sm:$0xff]
        %v635 = vld [vmem:[%s633 + $0x8] sm:$0xff]
        %s636 = scalar_lea.vmem %s3, 16
        %v637 = vld [vmem:[%s636] sm:$0xff]
        %v638 = vld [vmem:[%s636 + $0x8] sm:$0xff]
        %640 = vset.pattern.permute.xlu0 0
        %641 = vperm.xlu0 %640, %v637
        %v642 = vpop.permute.xlu0 %641
        %645 = vset.pattern.permute.xlu0 0
        %646 = vperm.xlu0 %645, %v638
        %v647 = vpop.permute.xlu0 %646
        %v650 = vsel %vm404, %v634, 0
        %v653 = vsel %vm404, %v635, 0
        %655 = vmatpush.msra.mxu0 0.0
        %656 = vmatpush.msra.mxu0 0.0
        %657 = vmatpush.msra.mxu0 0.0
        %658 = vmatpush.msra.mxu0 0.0
        %659 = vmatpush.msra.mxu0 0.0
        %660 = vmatpush.msra.mxu0 0.0
        %661 = vmatpush.msra.mxu0 0.0
        %662 = vmatpush.msra.mxu0 0.0
        %663 = vmatpush.msra.mxu0 0.0
        %664 = vmatpush.msra.mxu0 0.0
        %665 = vmatpush.msra.mxu0 0.0
        %666 = vmatpush.msra.mxu0 0.0
        %667 = vmatpush.msra.mxu0 0.0
        %668 = vmatpush.msra.mxu0 0.0
        %669 = vmatpush.msra.mxu0 0.0
        %670 = vmatpush.msra.mxu0 %v630
        %671 = vmatmul.f32.gmra.mxu0 %v650
        %v672 = vpop.f32.mrf.mxu0
        %v673 = vadd.f32 %v642, %v672
        %674 = vmatmul.f32.gmra.mxu0 %v653
        %v675 = vpop.f32.mrf.mxu0
        %v676 = vadd.f32 %v647, %v675
        %677 = vdwg.mxu0
        %678 = vmatpush.msra.mxu0 0.0
        %679 = vmatpush.msra.mxu0 0.0
        %680 = vmatpush.msra.mxu0 0.0
        %681 = vmatpush.msra.mxu0 0.0
        %682 = vmatpush.msra.mxu0 0.0
        %683 = vmatpush.msra.mxu0 0.0
        %684 = vmatpush.msra.mxu0 0.0
        %685 = vmatpush.msra.mxu0 0.0
        %686 = vmatpush.msra.mxu0 0.0
        %687 = vmatpush.msra.mxu0 0.0
        %688 = vmatpush.msra.mxu0 0.0
        %689 = vmatpush.msra.mxu0 0.0
        %690 = vmatpush.msra.mxu0 0.0
        %691 = vmatpush.msra.mxu0 0.0
        %692 = vmatpush.msra.mxu0 0.0
        %693 = vmatpush.msra.mxu0 %v631
        %694 = vmatmul.f32.gmra.mxu0 %v650
        %v695 = vpop.f32.mrf.mxu0
        %v696 = vadd.f32 %v642, %v695
        %697 = vmatmul.f32.gmra.mxu0 %v653
        %v698 = vpop.f32.mrf.mxu0
        %v699 = vadd.f32 %v647, %v698
        %700 = vdwg.mxu0
        %701 = vmatpush.msra.mxu0 0.0
        %702 = vmatpush.msra.mxu0 0.0
        %703 = vmatpush.msra.mxu0 0.0
        %704 = vmatpush.msra.mxu0 0.0
        %705 = vmatpush.msra.mxu0 0.0
        %706 = vmatpush.msra.mxu0 0.0
        %707 = vmatpush.msra.mxu0 0.0
        %708 = vmatpush.msra.mxu0 0.0
        %709 = vmatpush.msra.mxu0 0.0
        %710 = vmatpush.msra.mxu0 0.0
        %711 = vmatpush.msra.mxu0 0.0
        %712 = vmatpush.msra.mxu0 0.0
        %713 = vmatpush.msra.mxu0 0.0
        %714 = vmatpush.msra.mxu0 0.0
        %715 = vmatpush.msra.mxu0 0.0
        %716 = vmatpush.msra.mxu0 %v632
        %717 = vmatmul.f32.gmra.mxu0 %v650
        %v718 = vpop.f32.mrf.mxu0
        %v719 = vadd.f32 %v642, %v718
        %720 = vmatmul.f32.gmra.mxu0 %v653
        %v721 = vpop.f32.mrf.mxu0
        %v722 = vadd.f32 %v647, %v721
        %723 = vdwg.mxu0
        %s724 = scalar_lea.vmem %s215, 24 [#allocation3]
        %725 = vst [vmem:[%s724] sm:$0xff] %v676
        %726 = vst [vmem:[%s724 + $0x8] sm:$0xff] %v699
        %727 = vst [vmem:[%s724 + $0x10] sm:$0xff] %v722
        %v728 = vadd.f32 %v673, %v483
        %v729 = vadd.f32 %v696, %v484
        %v730 = vadd.f32 %v719, %v485
        %s731 = scalar_lea.vmem [#allocation2], 16
        %v732 = vld [vmem:[%s731] sm:$0xff]
        %733 = vst [vmem:[%s731] sm:$0xff] %v730
        %vm734 = vcmp.lt.s32.totalorder %v241, 380
        %vm735 = vcmp.lt.s32.totalorder %v242, 380
        %vm736 = vcmp.lt.s32.totalorder %v243, 380
        %v737 = vsel %vm734, %v728, 0.0
        %v738 = vsel %vm735, %v729, 0.0
        %v739 = vsel %vm736, %v730, %v732
        %740 = vrot.lane.b32.xlu0 %v737, 4
        %v741 = vpop.permute.xlu0 %740
        %742 = vrot.lane.b32.xlu0 %v738, 4
        %v743 = vpop.permute.xlu0 %742
        %744 = vrot.lane.b32.xlu0 %v739, 4
        %v745 = vpop.permute.xlu0 %744
        %vm746 = vcmp.lt.s32.totalorder %v241, 4
        %v747 = vsel %vm746, %v743, %v745
        %v748 = vsel %vm746, %v741, %v743
        %v749 = vsel %vm746, %v745, %v741
        %s750 = scalar_lea.vmem %s1, 16
        %v751 = vld [vmem:[%s750] sm:$0xff]
        %v753 = vsel %vm263, %v751, 0
        %755 = vmatpush.msra.mxu0 0.0
        %756 = vmatpush.msra.mxu0 0.0
        %757 = vmatpush.msra.mxu0 0.0
        %758 = vmatpush.msra.mxu0 0.0
        %759 = vmatpush.msra.mxu0 0.0
        %760 = vmatpush.msra.mxu0 0.0
        %761 = vmatpush.msra.mxu0 0.0
        %762 = vmatpush.msra.mxu0 0.0
        %763 = vmatpush.msra.mxu0 0.0
        %764 = vmatpush.msra.mxu0 0.0
        %765 = vmatpush.msra.mxu0 0.0
        %766 = vmatpush.msra.mxu0 0.0
        %767 = vmatpush.msra.mxu0 0.0
        %768 = vmatpush.msra.mxu0 0.0
        %769 = vmatpush.msra.mxu0 %v728
        %770 = vmatpush.msra.mxu0 %v749
        %771 = vmatmul.f32.gmra.mxu0 %v753
        %v772 = vpop.f32.mrf.mxu0
        %v773 = vadd.f32 0.0, %v772
        %774 = vdwg.mxu0
        %775 = vmatpush.msra.mxu0 0.0
        %776 = vmatpush.msra.mxu0 0.0
        %777 = vmatpush.msra.mxu0 0.0
        %778 = vmatpush.msra.mxu0 0.0
        %779 = vmatpush.msra.mxu0 0.0
        %780 = vmatpush.msra.mxu0 0.0
        %781 = vmatpush.msra.mxu0 0.0
        %782 = vmatpush.msra.mxu0 0.0
        %783 = vmatpush.msra.mxu0 0.0
        %784 = vmatpush.msra.mxu0 0.0
        %785 = vmatpush.msra.mxu0 0.0
        %786 = vmatpush.msra.mxu0 0.0
        %787 = vmatpush.msra.mxu0 0.0
        %788 = vmatpush.msra.mxu0 0.0
        %789 = vmatpush.msra.mxu0 %v729
        %790 = vmatpush.msra.mxu0 %v748
        %791 = vmatmul.f32.gmra.mxu0 %v753
        %v792 = vpop.f32.mrf.mxu0
        %v793 = vadd.f32 0.0, %v792
        %794 = vdwg.mxu0
        %795 = vmatpush.msra.mxu0 0.0
        %796 = vmatpush.msra.mxu0 0.0
        %797 = vmatpush.msra.mxu0 0.0
        %798 = vmatpush.msra.mxu0 0.0
        %799 = vmatpush.msra.mxu0 0.0
        %800 = vmatpush.msra.mxu0 0.0
        %801 = vmatpush.msra.mxu0 0.0
        %802 = vmatpush.msra.mxu0 0.0
        %803 = vmatpush.msra.mxu0 0.0
        %804 = vmatpush.msra.mxu0 0.0
        %805 = vmatpush.msra.mxu0 0.0
        %806 = vmatpush.msra.mxu0 0.0
        %807 = vmatpush.msra.mxu0 0.0
        %808 = vmatpush.msra.mxu0 0.0
        %809 = vmatpush.msra.mxu0 %v730
        %810 = vmatpush.msra.mxu0 %v747
        %811 = vmatmul.f32.gmra.mxu0 %v753
        %v812 = vpop.f32.mrf.mxu0
        %v813 = vadd.f32 0.0, %v812
        %814 = vdwg.mxu0
        %v815 = vtanh.pop %v773
        %v816 = vtanh.pop %v793
        %v817 = vtanh.pop %v813
        %v818 = vxor.u32 %v773, 2147483648
        %v819 = vxor.u32 %v793, 2147483648
        %v820 = vxor.u32 %v813, 2147483648
        %v821 = vmul.f32 %v818, 1.442695
        %v822 = vpow.pop %v821
        %v823 = vmul.f32 %v819, 1.442695
        %v824 = vpow.pop %v823
        %v825 = vmul.f32 %v820, 1.442695
        %v826 = vpow.pop %v825
        %v827 = vadd.f32 %v822, 1.0
        %v828 = vadd.f32 %v824, 1.0
        %v829 = vadd.f32 %v826, 1.0
        %v830 = vrcp.pop %v827
        %v831 = vmul.f32 %v827, %v830
        %v832 = vsub.f32 1.0, %v831
        %v833 = vmul.f32 %v830, %v832
        %v834 = vadd.f32 %v830, %v833
        %vm835 = vweird.f32 %v827
        %vm836 = vweird.f32 %v830
        %vm837 = vmor %vm835, %vm836
        %v838 = vsel %vm837, %v830, %v834
        %v839 = vand.u32 2147483647, %v827
        %vm840 = vcmp.eq.f32.partialorder %v839, 8.507059e+37
        %v841 = vand.u32 %v827, 2147483648
        %v842 = vor.u32 1.1754944e-38, %v841
        %v843 = vsel %vm840, %v842, %v838
        %v844 = vmul.f32 1.0, %v843
        %v845 = vrcp.pop %v828
        %v846 = vmul.f32 %v828, %v845
        %v847 = vsub.f32 1.0, %v846
        %v848 = vmul.f32 %v845, %v847
        %v849 = vadd.f32 %v845, %v848
        %vm850 = vweird.f32 %v828
        %vm851 = vweird.f32 %v845
        %vm852 = vmor %vm850, %vm851
        %v853 = vsel %vm852, %v845, %v849
        %v854 = vand.u32 2147483647, %v828
        %vm855 = vcmp.eq.f32.partialorder %v854, 8.507059e+37
        %v856 = vand.u32 %v828, 2147483648
        %v857 = vor.u32 1.1754944e-38, %v856
        %v858 = vsel %vm855, %v857, %v853
        %v859 = vmul.f32 1.0, %v858
        %v860 = vrcp.pop %v829
        %v861 = vmul.f32 %v829, %v860
        %v862 = vsub.f32 1.0, %v861
        %v863 = vmul.f32 %v860, %v862
        %v864 = vadd.f32 %v860, %v863
        %vm865 = vweird.f32 %v829
        %vm866 = vweird.f32 %v860
        %vm867 = vmor %vm865, %vm866
        %v868 = vsel %vm867, %v860, %v864
        %v869 = vand.u32 2147483647, %v829
        %vm870 = vcmp.eq.f32.partialorder %v869, 8.507059e+37
        %v871 = vand.u32 %v829, 2147483648
        %v872 = vor.u32 1.1754944e-38, %v871
        %v873 = vsel %vm870, %v872, %v868
        %v874 = vmul.f32 1.0, %v873
        %v875 = vmul.f32 %v815, %v844
        %v876 = vmul.f32 %v816, %v859
        %v877 = vmul.f32 %v817, %v874
        %s878 = scalar_lea.vmem %s2, 32
        %v879 = vld [vmem:[%s878] sm:$0xff]
        %v880 = vld [vmem:[%s878 + $0x8] sm:$0xff]
        %s881 = scalar_lea.vmem %s3, 32
        %v882 = vld [vmem:[%s881] sm:$0xff]
        %v883 = vld [vmem:[%s881 + $0x8] sm:$0xff]
        %885 = vset.pattern.permute.xlu0 0
        %886 = vperm.xlu0 %885, %v882
        %v887 = vpop.permute.xlu0 %886
        %890 = vset.pattern.permute.xlu0 0
        %891 = vperm.xlu0 %890, %v883
        %v892 = vpop.permute.xlu0 %891
        %v895 = vsel %vm404, %v879, 0
        %v898 = vsel %vm404, %v880, 0
        %900 = vmatpush.msra.mxu0 0.0
        %901 = vmatpush.msra.mxu0 0.0
        %902 = vmatpush.msra.mxu0 0.0
        %903 = vmatpush.msra.mxu0 0.0
        %904 = vmatpush.msra.mxu0 0.0
        %905 = vmatpush.msra.mxu0 0.0
        %906 = vmatpush.msra.mxu0 0.0
        %907 = vmatpush.msra.mxu0 0.0
        %908 = vmatpush.msra.mxu0 0.0
        %909 = vmatpush.msra.mxu0 0.0
        %910 = vmatpush.msra.mxu0 0.0
        %911 = vmatpush.msra.mxu0 0.0
        %912 = vmatpush.msra.mxu0 0.0
        %913 = vmatpush.msra.mxu0 0.0
        %914 = vmatpush.msra.mxu0 0.0
        %915 = vmatpush.msra.mxu0 %v875
        %916 = vmatmul.f32.gmra.mxu0 %v895
        %v917 = vpop.f32.mrf.mxu0
        %v918 = vadd.f32 %v887, %v917
        %919 = vmatmul.f32.gmra.mxu0 %v898
        %v920 = vpop.f32.mrf.mxu0
        %v921 = vadd.f32 %v892, %v920
        %922 = vdwg.mxu0
        %923 = vmatpush.msra.mxu0 0.0
        %924 = vmatpush.msra.mxu0 0.0
        %925 = vmatpush.msra.mxu0 0.0
        %926 = vmatpush.msra.mxu0 0.0
        %927 = vmatpush.msra.mxu0 0.0
        %928 = vmatpush.msra.mxu0 0.0
        %929 = vmatpush.msra.mxu0 0.0
        %930 = vmatpush.msra.mxu0 0.0
        %931 = vmatpush.msra.mxu0 0.0
        %932 = vmatpush.msra.mxu0 0.0
        %933 = vmatpush.msra.mxu0 0.0
        %934 = vmatpush.msra.mxu0 0.0
        %935 = vmatpush.msra.mxu0 0.0
        %936 = vmatpush.msra.mxu0 0.0
        %937 = vmatpush.msra.mxu0 0.0
        %938 = vmatpush.msra.mxu0 %v876
        %939 = vmatmul.f32.gmra.mxu0 %v895
        %v940 = vpop.f32.mrf.mxu0
        %v941 = vadd.f32 %v887, %v940
        %942 = vmatmul.f32.gmra.mxu0 %v898
        %v943 = vpop.f32.mrf.mxu0
        %v944 = vadd.f32 %v892, %v943
        %945 = vdwg.mxu0
        %946 = vmatpush.msra.mxu0 0.0
        %947 = vmatpush.msra.mxu0 0.0
        %948 = vmatpush.msra.mxu0 0.0
        %949 = vmatpush.msra.mxu0 0.0
        %950 = vmatpush.msra.mxu0 0.0
        %951 = vmatpush.msra.mxu0 0.0
        %952 = vmatpush.msra.mxu0 0.0
        %953 = vmatpush.msra.mxu0 0.0
        %954 = vmatpush.msra.mxu0 0.0
        %955 = vmatpush.msra.mxu0 0.0
        %956 = vmatpush.msra.mxu0 0.0
        %957 = vmatpush.msra.mxu0 0.0
        %958 = vmatpush.msra.mxu0 0.0
        %959 = vmatpush.msra.mxu0 0.0
        %960 = vmatpush.msra.mxu0 0.0
        %961 = vmatpush.msra.mxu0 %v877
        %962 = vmatmul.f32.gmra.mxu0 %v895
        %v963 = vpop.f32.mrf.mxu0
        %v964 = vadd.f32 %v887, %v963
        %965 = vmatmul.f32.gmra.mxu0 %v898
        %v966 = vpop.f32.mrf.mxu0
        %v967 = vadd.f32 %v892, %v966
        %968 = vdwg.mxu0
        %s969 = scalar_lea.vmem %s215, 48 [#allocation3]
        %970 = vst [vmem:[%s969] sm:$0xff] %v921
        %971 = vst [vmem:[%s969 + $0x8] sm:$0xff] %v944
        %972 = vst [vmem:[%s969 + $0x10] sm:$0xff] %v967
        %v973 = vadd.f32 %v918, %v728
        %v974 = vadd.f32 %v941, %v729
        %v975 = vadd.f32 %v964, %v730
        %s976 = scalar_lea.vmem [#allocation2], 24
        %v977 = vld [vmem:[%s976] sm:$0xff]
        %978 = vst [vmem:[%s976] sm:$0xff] %v975
        %v979 = vsel %vm246, %v973, 0.0
        %v980 = vsel %vm247, %v974, 0.0
        %v981 = vsel %vm248, %v975, %v977
        %982 = vrot.lane.b32.xlu0 %v979, 1
        %v983 = vpop.permute.xlu0 %982
        %984 = vrot.lane.b32.xlu0 %v980, 1
        %v985 = vpop.permute.xlu0 %984
        %986 = vrot.lane.b32.xlu0 %v981, 1
        %v987 = vpop.permute.xlu0 %986
        %v988 = vsel %vm258, %v985, %v987
        %v989 = vsel %vm258, %v983, %v985
        %v990 = vsel %vm258, %v987, %v983
        %s991 = scalar_lea.vmem %s1, 24
        %v992 = vld [vmem:[%s991] sm:$0xff]
        %v994 = vsel %vm263, %v992, 0
        %996 = vmatpush.msra.mxu0 0.0
        %997 = vmatpush.msra.mxu0 0.0
        %998 = vmatpush.msra.mxu0 0.0
        %999 = vmatpush.msra.mxu0 0.0
        %1000 = vmatpush.msra.mxu0 0.0
        %1001 = vmatpush.msra.mxu0 0.0
        %1002 = vmatpush.msra.mxu0 0.0
        %1003 = vmatpush.msra.mxu0 0.0
        %1004 = vmatpush.msra.mxu0 0.0
        %1005 = vmatpush.msra.mxu0 0.0
        %1006 = vmatpush.msra.mxu0 0.0
        %1007 = vmatpush.msra.mxu0 0.0
        %1008 = vmatpush.msra.mxu0 0.0
        %1009 = vmatpush.msra.mxu0 0.0
        %1010 = vmatpush.msra.mxu0 %v973
        %1011 = vmatpush.msra.mxu0 %v990
        %1012 = vmatmul.f32.gmra.mxu0 %v994
        %v1013 = vpop.f32.mrf.mxu0
        %v1014 = vadd.f32 0.0, %v1013
        %1015 = vdwg.mxu0
        %1016 = vmatpush.msra.mxu0 0.0
        %1017 = vmatpush.msra.mxu0 0.0
        %1018 = vmatpush.msra.mxu0 0.0
        %1019 = vmatpush.msra.mxu0 0.0
        %1020 = vmatpush.msra.mxu0 0.0
        %1021 = vmatpush.msra.mxu0 0.0
        %1022 = vmatpush.msra.mxu0 0.0
        %1023 = vmatpush.msra.mxu0 0.0
        %1024 = vmatpush.msra.mxu0 0.0
        %1025 = vmatpush.msra.mxu0 0.0
        %1026 = vmatpush.msra.mxu0 0.0
        %1027 = vmatpush.msra.mxu0 0.0
        %1028 = vmatpush.msra.mxu0 0.0
        %1029 = vmatpush.msra.mxu0 0.0
        %1030 = vmatpush.msra.mxu0 %v974
        %1031 = vmatpush.msra.mxu0 %v989
        %1032 = vmatmul.f32.gmra.mxu0 %v994
        %v1033 = vpop.f32.mrf.mxu0
        %v1034 = vadd.f32 0.0, %v1033
        %1035 = vdwg.mxu0
        %1036 = vmatpush.msra.mxu0 0.0
        %1037 = vmatpush.msra.mxu0 0.0
        %1038 = vmatpush.msra.mxu0 0.0
        %1039 = vmatpush.msra.mxu0 0.0
        %1040 = vmatpush.msra.mxu0 0.0
        %1041 = vmatpush.msra.mxu0 0.0
        %1042 = vmatpush.msra.mxu0 0.0
        %1043 = vmatpush.msra.mxu0 0.0
        %1044 = vmatpush.msra.mxu0 0.0
        %1045 = vmatpush.msra.mxu0 0.0
        %1046 = vmatpush.msra.mxu0 0.0
        %1047 = vmatpush.msra.mxu0 0.0
        %1048 = vmatpush.msra.mxu0 0.0
        %1049 = vmatpush.msra.mxu0 0.0
        %1050 = vmatpush.msra.mxu0 %v975
        %1051 = vmatpush.msra.mxu0 %v988
        %1052 = vmatmul.f32.gmra.mxu0 %v994
        %v1053 = vpop.f32.mrf.mxu0
        %v1054 = vadd.f32 0.0, %v1053
        %1055 = vdwg.mxu0
        %v1056 = vtanh.pop %v1014
        %v1057 = vtanh.pop %v1034
        %v1058 = vtanh.pop %v1054
        %v1059 = vxor.u32 %v1014, 2147483648
        %v1060 = vxor.u32 %v1034, 2147483648
        %v1061 = vxor.u32 %v1054, 2147483648
        %v1062 = vmul.f32 %v1059, 1.442695
        %v1063 = vpow.pop %v1062
        %v1064 = vmul.f32 %v1060, 1.442695
        %v1065 = vpow.pop %v1064
        %v1066 = vmul.f32 %v1061, 1.442695
        %v1067 = vpow.pop %v1066
        %v1068 = vadd.f32 %v1063, 1.0
        %v1069 = vadd.f32 %v1065, 1.0
        %v1070 = vadd.f32 %v1067, 1.0
        %v1071 = vrcp.pop %v1068
        %v1072 = vmul.f32 %v1068, %v1071
        %v1073 = vsub.f32 1.0, %v1072
        %v1074 = vmul.f32 %v1071, %v1073
        %v1075 = vadd.f32 %v1071, %v1074
        %vm1076 = vweird.f32 %v1068
        %vm1077 = vweird.f32 %v1071
        %vm1078 = vmor %vm1076, %vm1077
        %v1079 = vsel %vm1078, %v1071, %v1075
        %v1080 = vand.u32 2147483647, %v1068
        %vm1081 = vcmp.eq.f32.partialorder %v1080, 8.507059e+37
        %v1082 = vand.u32 %v1068, 2147483648
        %v1083 = vor.u32 1.1754944e-38, %v1082
        %v1084 = vsel %vm1081, %v1083, %v1079
        %v1085 = vmul.f32 1.0, %v1084
        %v1086 = vrcp.pop %v1069
        %v1087 = vmul.f32 %v1069, %v1086
        %v1088 = vsub.f32 1.0, %v1087
        %v1089 = vmul.f32 %v1086, %v1088
        %v1090 = vadd.f32 %v1086, %v1089
        %vm1091 = vweird.f32 %v1069
        %vm1092 = vweird.f32 %v1086
        %vm1093 = vmor %vm1091, %vm1092
        %v1094 = vsel %vm1093, %v1086, %v1090
        %v1095 = vand.u32 2147483647, %v1069
        %vm1096 = vcmp.eq.f32.partialorder %v1095, 8.507059e+37
        %v1097 = vand.u32 %v1069, 2147483648
        %v1098 = vor.u32 1.1754944e-38, %v1097
        %v1099 = vsel %vm1096, %v1098, %v1094
        %v1100 = vmul.f32 1.0, %v1099
        %v1101 = vrcp.pop %v1070
        %v1102 = vmul.f32 %v1070, %v1101
        %v1103 = vsub.f32 1.0, %v1102
        %v1104 = vmul.f32 %v1101, %v1103
        %v1105 = vadd.f32 %v1101, %v1104
        %vm1106 = vweird.f32 %v1070
        %vm1107 = vweird.f32 %v1101
        %vm1108 = vmor %vm1106, %vm1107
        %v1109 = vsel %vm1108, %v1101, %v1105
        %v1110 = vand.u32 2147483647, %v1070
        %vm1111 = vcmp.eq.f32.partialorder %v1110, 8.507059e+37
        %v1112 = vand.u32 %v1070, 2147483648
        %v1113 = vor.u32 1.1754944e-38, %v1112
        %v1114 = vsel %vm1111, %v1113, %v1109
        %v1115 = vmul.f32 1.0, %v1114
        %v1116 = vmul.f32 %v1056, %v1085
        %v1117 = vmul.f32 %v1057, %v1100
        %v1118 = vmul.f32 %v1058, %v1115
        %s1119 = scalar_lea.vmem %s2, 48
        %v1120 = vld [vmem:[%s1119] sm:$0xff]
        %v1121 = vld [vmem:[%s1119 + $0x8] sm:$0xff]
        %s1122 = scalar_lea.vmem %s3, 48
        %v1123 = vld [vmem:[%s1122] sm:$0xff]
        %v1124 = vld [vmem:[%s1122 + $0x8] sm:$0xff]
        %1126 = vset.pattern.permute.xlu0 0
        %1127 = vperm.xlu0 %1126, %v1123
        %v1128 = vpop.permute.xlu0 %1127
        %1131 = vset.pattern.permute.xlu0 0
        %1132 = vperm.xlu0 %1131, %v1124
        %v1133 = vpop.permute.xlu0 %1132
        %v1136 = vsel %vm404, %v1120, 0
        %v1139 = vsel %vm404, %v1121, 0
        %1141 = vmatpush.msra.mxu0 0.0
        %1142 = vmatpush.msra.mxu0 0.0
        %1143 = vmatpush.msra.mxu0 0.0
        %1144 = vmatpush.msra.mxu0 0.0
        %1145 = vmatpush.msra.mxu0 0.0
        %1146 = vmatpush.msra.mxu0 0.0
        %1147 = vmatpush.msra.mxu0 0.0
        %1148 = vmatpush.msra.mxu0 0.0
        %1149 = vmatpush.msra.mxu0 0.0
        %1150 = vmatpush.msra.mxu0 0.0
        %1151 = vmatpush.msra.mxu0 0.0
        %1152 = vmatpush.msra.mxu0 0.0
        %1153 = vmatpush.msra.mxu0 0.0
        %1154 = vmatpush.msra.mxu0 0.0
        %1155 = vmatpush.msra.mxu0 0.0
        %1156 = vmatpush.msra.mxu0 %v1116
        %1157 = vmatmul.f32.gmra.mxu0 %v1136
        %v1158 = vpop.f32.mrf.mxu0
        %v1159 = vadd.f32 %v1128, %v1158
        %1160 = vmatmul.f32.gmra.mxu0 %v1139
        %v1161 = vpop.f32.mrf.mxu0
        %v1162 = vadd.f32 %v1133, %v1161
        %1163 = vdwg.mxu0
        %1164 = vmatpush.msra.mxu0 0.0
        %1165 = vmatpush.msra.mxu0 0.0
        %1166 = vmatpush.msra.mxu0 0.0
        %1167 = vmatpush.msra.mxu0 0.0
        %1168 = vmatpush.msra.mxu0 0.0
        %1169 = vmatpush.msra.mxu0 0.0
        %1170 = vmatpush.msra.mxu0 0.0
        %1171 = vmatpush.msra.mxu0 0.0
        %1172 = vmatpush.msra.mxu0 0.0
        %1173 = vmatpush.msra.mxu0 0.0
        %1174 = vmatpush.msra.mxu0 0.0
        %1175 = vmatpush.msra.mxu0 0.0
        %1176 = vmatpush.msra.mxu0 0.0
        %1177 = vmatpush.msra.mxu0 0.0
        %1178 = vmatpush.msra.mxu0 0.0
        %1179 = vmatpush.msra.mxu0 %v1117
        %1180 = vmatmul.f32.gmra.mxu0 %v1136
        %v1181 = vpop.f32.mrf.mxu0
        %v1182 = vadd.f32 %v1128, %v1181
        %1183 = vmatmul.f32.gmra.mxu0 %v1139
        %v1184 = vpop.f32.mrf.mxu0
        %v1185 = vadd.f32 %v1133, %v1184
        %1186 = vdwg.mxu0
        %1187 = vmatpush.msra.mxu0 0.0
        %1188 = vmatpush.msra.mxu0 0.0
        %1189 = vmatpush.msra.mxu0 0.0
        %1190 = vmatpush.msra.mxu0 0.0
        %1191 = vmatpush.msra.mxu0 0.0
        %1192 = vmatpush.msra.mxu0 0.0
        %1193 = vmatpush.msra.mxu0 0.0
        %1194 = vmatpush.msra.mxu0 0.0
        %1195 = vmatpush.msra.mxu0 0.0
        %1196 = vmatpush.msra.mxu0 0.0
        %1197 = vmatpush.msra.mxu0 0.0
        %1198 = vmatpush.msra.mxu0 0.0
        %1199 = vmatpush.msra.mxu0 0.0
        %1200 = vmatpush.msra.mxu0 0.0
        %1201 = vmatpush.msra.mxu0 0.0
        %1202 = vmatpush.msra.mxu0 %v1118
        %1203 = vmatmul.f32.gmra.mxu0 %v1136
        %v1204 = vpop.f32.mrf.mxu0
        %v1205 = vadd.f32 %v1128, %v1204
        %1206 = vmatmul.f32.gmra.mxu0 %v1139
        %v1207 = vpop.f32.mrf.mxu0
        %v1208 = vadd.f32 %v1133, %v1207
        %1209 = vdwg.mxu0
        %s1210 = scalar_lea.vmem %s215, 72 [#allocation3]
        %1211 = vst [vmem:[%s1210] sm:$0xff] %v1162
        %1212 = vst [vmem:[%s1210 + $0x8] sm:$0xff] %v1185
        %1213 = vst [vmem:[%s1210 + $0x10] sm:$0xff] %v1208
        %v1214 = vadd.f32 %v1159, %v973
        %v1215 = vadd.f32 %v1182, %v974
        %v1216 = vadd.f32 %v1205, %v975
        %s1217 = scalar_lea.vmem [#allocation2], 32
        %v1218 = vld [vmem:[%s1217] sm:$0xff]
        %1219 = vst [vmem:[%s1217] sm:$0xff] %v1216
        %v1220 = vsel %vm489, %v1214, 0.0
        %v1221 = vsel %vm490, %v1215, 0.0
        %v1222 = vsel %vm491, %v1216, %v1218
        %1223 = vrot.lane.b32.xlu0 %v1220, 2
        %v1224 = vpop.permute.xlu0 %1223
        %1225 = vrot.lane.b32.xlu0 %v1221, 2
        %v1226 = vpop.permute.xlu0 %1225
        %1227 = vrot.lane.b32.xlu0 %v1222, 2
        %v1228 = vpop.permute.xlu0 %1227
        %v1229 = vsel %vm501, %v1226, %v1228
        %v1230 = vsel %vm501, %v1224, %v1226
        %v1231 = vsel %vm501, %v1228, %v1224
        %s1232 = scalar_lea.vmem %s1, 32
        %v1233 = vld [vmem:[%s1232] sm:$0xff]
        %v1235 = vsel %vm263, %v1233, 0
        %1237 = vmatpush.msra.mxu0 0.0
        %1238 = vmatpush.msra.mxu0 0.0
        %1239 = vmatpush.msra.mxu0 0.0
        %1240 = vmatpush.msra.mxu0 0.0
        %1241 = vmatpush.msra.mxu0 0.0
        %1242 = vmatpush.msra.mxu0 0.0
        %1243 = vmatpush.msra.mxu0 0.0
        %1244 = vmatpush.msra.mxu0 0.0
        %1245 = vmatpush.msra.mxu0 0.0
        %1246 = vmatpush.msra.mxu0 0.0
        %1247 = vmatpush.msra.mxu0 0.0
        %1248 = vmatpush.msra.mxu0 0.0
        %1249 = vmatpush.msra.mxu0 0.0
        %1250 = vmatpush.msra.mxu0 0.0
        %1251 = vmatpush.msra.mxu0 %v1214
        %1252 = vmatpush.msra.mxu0 %v1231
        %1253 = vmatmul.f32.gmra.mxu0 %v1235
        %v1254 = vpop.f32.mrf.mxu0
        %v1255 = vadd.f32 0.0, %v1254
        %1256 = vdwg.mxu0
        %1257 = vmatpush.msra.mxu0 0.0
        %1258 = vmatpush.msra.mxu0 0.0
        %1259 = vmatpush.msra.mxu0 0.0
        %1260 = vmatpush.msra.mxu0 0.0
        %1261 = vmatpush.msra.mxu0 0.0
        %1262 = vmatpush.msra.mxu0 0.0
        %1263 = vmatpush.msra.mxu0 0.0
        %1264 = vmatpush.msra.mxu0 0.0
        %1265 = vmatpush.msra.mxu0 0.0
        %1266 = vmatpush.msra.mxu0 0.0
        %1267 = vmatpush.msra.mxu0 0.0
        %1268 = vmatpush.msra.mxu0 0.0
        %1269 = vmatpush.msra.mxu0 0.0
        %1270 = vmatpush.msra.mxu0 0.0
        %1271 = vmatpush.msra.mxu0 %v1215
        %1272 = vmatpush.msra.mxu0 %v1230
        %1273 = vmatmul.f32.gmra.mxu0 %v1235
        %v1274 = vpop.f32.mrf.mxu0
        %v1275 = vadd.f32 0.0, %v1274
        %1276 = vdwg.mxu0
        %1277 = vmatpush.msra.mxu0 0.0
        %1278 = vmatpush.msra.mxu0 0.0
        %1279 = vmatpush.msra.mxu0 0.0
        %1280 = vmatpush.msra.mxu0 0.0
        %1281 = vmatpush.msra.mxu0 0.0
        %1282 = vmatpush.msra.mxu0 0.0
        %1283 = vmatpush.msra.mxu0 0.0
        %1284 = vmatpush.msra.mxu0 0.0
        %1285 = vmatpush.msra.mxu0 0.0
        %1286 = vmatpush.msra.mxu0 0.0
        %1287 = vmatpush.msra.mxu0 0.0
        %1288 = vmatpush.msra.mxu0 0.0
        %1289 = vmatpush.msra.mxu0 0.0
        %1290 = vmatpush.msra.mxu0 0.0
        %1291 = vmatpush.msra.mxu0 %v1216
        %1292 = vmatpush.msra.mxu0 %v1229
        %1293 = vmatmul.f32.gmra.mxu0 %v1235
        %v1294 = vpop.f32.mrf.mxu0
        %v1295 = vadd.f32 0.0, %v1294
        %1296 = vdwg.mxu0
        %v1297 = vtanh.pop %v1255
        %v1298 = vtanh.pop %v1275
        %v1299 = vtanh.pop %v1295
        %v1300 = vxor.u32 %v1255, 2147483648
        %v1301 = vxor.u32 %v1275, 2147483648
        %v1302 = vxor.u32 %v1295, 2147483648
        %v1303 = vmul.f32 %v1300, 1.442695
        %v1304 = vpow.pop %v1303
        %v1305 = vmul.f32 %v1301, 1.442695
        %v1306 = vpow.pop %v1305
        %v1307 = vmul.f32 %v1302, 1.442695
        %v1308 = vpow.pop %v1307
        %v1309 = vadd.f32 %v1304, 1.0
        %v1310 = vadd.f32 %v1306, 1.0
        %v1311 = vadd.f32 %v1308, 1.0
        %v1312 = vrcp.pop %v1309
        %v1313 = vmul.f32 %v1309, %v1312
        %v1314 = vsub.f32 1.0, %v1313
        %v1315 = vmul.f32 %v1312, %v1314
        %v1316 = vadd.f32 %v1312, %v1315
        %vm1317 = vweird.f32 %v1309
        %vm1318 = vweird.f32 %v1312
        %vm1319 = vmor %vm1317, %vm1318
        %v1320 = vsel %vm1319, %v1312, %v1316
        %v1321 = vand.u32 2147483647, %v1309
        %vm1322 = vcmp.eq.f32.partialorder %v1321, 8.507059e+37
        %v1323 = vand.u32 %v1309, 2147483648
        %v1324 = vor.u32 1.1754944e-38, %v1323
        %v1325 = vsel %vm1322, %v1324, %v1320
        %v1326 = vmul.f32 1.0, %v1325
        %v1327 = vrcp.pop %v1310
        %v1328 = vmul.f32 %v1310, %v1327
        %v1329 = vsub.f32 1.0, %v1328
        %v1330 = vmul.f32 %v1327, %v1329
        %v1331 = vadd.f32 %v1327, %v1330
        %vm1332 = vweird.f32 %v1310
        %vm1333 = vweird.f32 %v1327
        %vm1334 = vmor %vm1332, %vm1333
        %v1335 = vsel %vm1334, %v1327, %v1331
        %v1336 = vand.u32 2147483647, %v1310
        %vm1337 = vcmp.eq.f32.partialorder %v1336, 8.507059e+37
        %v1338 = vand.u32 %v1310, 2147483648
        %v1339 = vor.u32 1.1754944e-38, %v1338
        %v1340 = vsel %vm1337, %v1339, %v1335
        %v1341 = vmul.f32 1.0, %v1340
        %v1342 = vrcp.pop %v1311
        %v1343 = vmul.f32 %v1311, %v1342
        %v1344 = vsub.f32 1.0, %v1343
        %v1345 = vmul.f32 %v1342, %v1344
        %v1346 = vadd.f32 %v1342, %v1345
        %vm1347 = vweird.f32 %v1311
        %vm1348 = vweird.f32 %v1342
        %vm1349 = vmor %vm1347, %vm1348
        %v1350 = vsel %vm1349, %v1342, %v1346
        %v1351 = vand.u32 2147483647, %v1311
        %vm1352 = vcmp.eq.f32.partialorder %v1351, 8.507059e+37
        %v1353 = vand.u32 %v1311, 2147483648
        %v1354 = vor.u32 1.1754944e-38, %v1353
        %v1355 = vsel %vm1352, %v1354, %v1350
        %v1356 = vmul.f32 1.0, %v1355
        %v1357 = vmul.f32 %v1297, %v1326
        %v1358 = vmul.f32 %v1298, %v1341
        %v1359 = vmul.f32 %v1299, %v1356
        %s1360 = scalar_lea.vmem %s2, 64
        %v1361 = vld [vmem:[%s1360] sm:$0xff]
        %v1362 = vld [vmem:[%s1360 + $0x8] sm:$0xff]
        %s1363 = scalar_lea.vmem %s3, 64
        %v1364 = vld [vmem:[%s1363] sm:$0xff]
        %v1365 = vld [vmem:[%s1363 + $0x8] sm:$0xff]
        %1367 = vset.pattern.permute.xlu0 0
        %1368 = vperm.xlu0 %1367, %v1364
        %v1369 = vpop.permute.xlu0 %1368
        %1372 = vset.pattern.permute.xlu0 0
        %1373 = vperm.xlu0 %1372, %v1365
        %v1374 = vpop.permute.xlu0 %1373
        %v1377 = vsel %vm404, %v1361, 0
        %v1380 = vsel %vm404, %v1362, 0
        %1382 = vmatpush.msra.mxu0 0.0
        %1383 = vmatpush.msra.mxu0 0.0
        %1384 = vmatpush.msra.mxu0 0.0
        %1385 = vmatpush.msra.mxu0 0.0
        %1386 = vmatpush.msra.mxu0 0.0
        %1387 = vmatpush.msra.mxu0 0.0
        %1388 = vmatpush.msra.mxu0 0.0
        %1389 = vmatpush.msra.mxu0 0.0
        %1390 = vmatpush.msra.mxu0 0.0
        %1391 = vmatpush.msra.mxu0 0.0
        %1392 = vmatpush.msra.mxu0 0.0
        %1393 = vmatpush.msra.mxu0 0.0
        %1394 = vmatpush.msra.mxu0 0.0
        %1395 = vmatpush.msra.mxu0 0.0
        %1396 = vmatpush.msra.mxu0 0.0
        %1397 = vmatpush.msra.mxu0 %v1357
        %1398 = vmatmul.f32.gmra.mxu0 %v1377
        %v1399 = vpop.f32.mrf.mxu0
        %v1400 = vadd.f32 %v1369, %v1399
        %1401 = vmatmul.f32.gmra.mxu0 %v1380
        %v1402 = vpop.f32.mrf.mxu0
        %v1403 = vadd.f32 %v1374, %v1402
        %1404 = vdwg.mxu0
        %1405 = vmatpush.msra.mxu0 0.0
        %1406 = vmatpush.msra.mxu0 0.0
        %1407 = vmatpush.msra.mxu0 0.0
        %1408 = vmatpush.msra.mxu0 0.0
        %1409 = vmatpush.msra.mxu0 0.0
        %1410 = vmatpush.msra.mxu0 0.0
        %1411 = vmatpush.msra.mxu0 0.0
        %1412 = vmatpush.msra.mxu0 0.0
        %1413 = vmatpush.msra.mxu0 0.0
        %1414 = vmatpush.msra.mxu0 0.0
        %1415 = vmatpush.msra.mxu0 0.0
        %1416 = vmatpush.msra.mxu0 0.0
        %1417 = vmatpush.msra.mxu0 0.0
        %1418 = vmatpush.msra.mxu0 0.0
        %1419 = vmatpush.msra.mxu0 0.0
        %1420 = vmatpush.msra.mxu0 %v1358
        %1421 = vmatmul.f32.gmra.mxu0 %v1377
        %v1422 = vpop.f32.mrf.mxu0
        %v1423 = vadd.f32 %v1369, %v1422
        %1424 = vmatmul.f32.gmra.mxu0 %v1380
        %v1425 = vpop.f32.mrf.mxu0
        %v1426 = vadd.f32 %v1374, %v1425
        %1427 = vdwg.mxu0
        %1428 = vmatpush.msra.mxu0 0.0
        %1429 = vmatpush.msra.mxu0 0.0
        %1430 = vmatpush.msra.mxu0 0.0
        %1431 = vmatpush.msra.mxu0 0.0
        %1432 = vmatpush.msra.mxu0 0.0
        %1433 = vmatpush.msra.mxu0 0.0
        %1434 = vmatpush.msra.mxu0 0.0
        %1435 = vmatpush.msra.mxu0 0.0
        %1436 = vmatpush.msra.mxu0 0.0
        %1437 = vmatpush.msra.mxu0 0.0
        %1438 = vmatpush.msra.mxu0 0.0
        %1439 = vmatpush.msra.mxu0 0.0
        %1440 = vmatpush.msra.mxu0 0.0
        %1441 = vmatpush.msra.mxu0 0.0
        %1442 = vmatpush.msra.mxu0 0.0
        %1443 = vmatpush.msra.mxu0 %v1359
        %1444 = vmatmul.f32.gmra.mxu0 %v1377
        %v1445 = vpop.f32.mrf.mxu0
        %v1446 = vadd.f32 %v1369, %v1445
        %1447 = vmatmul.f32.gmra.mxu0 %v1380
        %v1448 = vpop.f32.mrf.mxu0
        %v1449 = vadd.f32 %v1374, %v1448
        %1450 = vdwg.mxu0
        %s1451 = scalar_lea.vmem %s215, 96 [#allocation3]
        %1452 = vst [vmem:[%s1451] sm:$0xff] %v1403
        %1453 = vst [vmem:[%s1451 + $0x8] sm:$0xff] %v1426
        %1454 = vst [vmem:[%s1451 + $0x10] sm:$0xff] %v1449
        %v1455 = vadd.f32 %v1400, %v1214
        %v1456 = vadd.f32 %v1423, %v1215
        %v1457 = vadd.f32 %v1446, %v1216
        %s1458 = scalar_lea.vmem [#allocation2], 40
        %v1459 = vld [vmem:[%s1458] sm:$0xff]
        %1460 = vst [vmem:[%s1458] sm:$0xff] %v1457
        %v1461 = vsel %vm734, %v1455, 0.0
        %v1462 = vsel %vm735, %v1456, 0.0
        %v1463 = vsel %vm736, %v1457, %v1459
        %1464 = vrot.lane.b32.xlu0 %v1461, 4
        %v1465 = vpop.permute.xlu0 %1464
        %1466 = vrot.lane.b32.xlu0 %v1462, 4
        %v1467 = vpop.permute.xlu0 %1466
        %1468 = vrot.lane.b32.xlu0 %v1463, 4
        %v1469 = vpop.permute.xlu0 %1468
        %v1470 = vsel %vm746, %v1467, %v1469
        %v1471 = vsel %vm746, %v1465, %v1467
        %v1472 = vsel %vm746, %v1469, %v1465
        %s1473 = scalar_lea.vmem %s1, 40
        %v1474 = vld [vmem:[%s1473] sm:$0xff]
        %v1476 = vsel %vm263, %v1474, 0
        %1478 = vmatpush.msra.mxu0 0.0
        %1479 = vmatpush.msra.mxu0 0.0
        %1480 = vmatpush.msra.mxu0 0.0
        %1481 = vmatpush.msra.mxu0 0.0
        %1482 = vmatpush.msra.mxu0 0.0
        %1483 = vmatpush.msra.mxu0 0.0
        %1484 = vmatpush.msra.mxu0 0.0
        %1485 = vmatpush.msra.mxu0 0.0
        %1486 = vmatpush.msra.mxu0 0.0
        %1487 = vmatpush.msra.mxu0 0.0
        %1488 = vmatpush.msra.mxu0 0.0
        %1489 = vmatpush.msra.mxu0 0.0
        %1490 = vmatpush.msra.mxu0 0.0
        %1491 = vmatpush.msra.mxu0 0.0
        %1492 = vmatpush.msra.mxu0 %v1455
        %1493 = vmatpush.msra.mxu0 %v1472
        %1494 = vmatmul.f32.gmra.mxu0 %v1476
        %v1495 = vpop.f32.mrf.mxu0
        %v1496 = vadd.f32 0.0, %v1495
        %1497 = vdwg.mxu0
        %1498 = vmatpush.msra.mxu0 0.0
        %1499 = vmatpush.msra.mxu0 0.0
        %1500 = vmatpush.msra.mxu0 0.0
        %1501 = vmatpush.msra.mxu0 0.0
        %1502 = vmatpush.msra.mxu0 0.0
        %1503 = vmatpush.msra.mxu0 0.0
        %1504 = vmatpush.msra.mxu0 0.0
        %1505 = vmatpush.msra.mxu0 0.0
        %1506 = vmatpush.msra.mxu0 0.0
        %1507 = vmatpush.msra.mxu0 0.0
        %1508 = vmatpush.msra.mxu0 0.0
        %1509 = vmatpush.msra.mxu0 0.0
        %1510 = vmatpush.msra.mxu0 0.0
        %1511 = vmatpush.msra.mxu0 0.0
        %1512 = vmatpush.msra.mxu0 %v1456
        %1513 = vmatpush.msra.mxu0 %v1471
        %1514 = vmatmul.f32.gmra.mxu0 %v1476
        %v1515 = vpop.f32.mrf.mxu0
        %v1516 = vadd.f32 0.0, %v1515
        %1517 = vdwg.mxu0
        %1518 = vmatpush.msra.mxu0 0.0
        %1519 = vmatpush.msra.mxu0 0.0
        %1520 = vmatpush.msra.mxu0 0.0
        %1521 = vmatpush.msra.mxu0 0.0
        %1522 = vmatpush.msra.mxu0 0.0
        %1523 = vmatpush.msra.mxu0 0.0
        %1524 = vmatpush.msra.mxu0 0.0
        %1525 = vmatpush.msra.mxu0 0.0
        %1526 = vmatpush.msra.mxu0 0.0
        %1527 = vmatpush.msra.mxu0 0.0
        %1528 = vmatpush.msra.mxu0 0.0
        %1529 = vmatpush.msra.mxu0 0.0
        %1530 = vmatpush.msra.mxu0 0.0
        %1531 = vmatpush.msra.mxu0 0.0
        %1532 = vmatpush.msra.mxu0 %v1457
        %1533 = vmatpush.msra.mxu0 %v1470
        %1534 = vmatmul.f32.gmra.mxu0 %v1476
        %v1535 = vpop.f32.mrf.mxu0
        %v1536 = vadd.f32 0.0, %v1535
        %1537 = vdwg.mxu0
        %v1538 = vtanh.pop %v1496
        %v1539 = vtanh.pop %v1516
        %v1540 = vtanh.pop %v1536
        %v1541 = vxor.u32 %v1496, 2147483648
        %v1542 = vxor.u32 %v1516, 2147483648
        %v1543 = vxor.u32 %v1536, 2147483648
        %v1544 = vmul.f32 %v1541, 1.442695
        %v1545 = vpow.pop %v1544
        %v1546 = vmul.f32 %v1542, 1.442695
        %v1547 = vpow.pop %v1546
        %v1548 = vmul.f32 %v1543, 1.442695
        %v1549 = vpow.pop %v1548
        %v1550 = vadd.f32 %v1545, 1.0
        %v1551 = vadd.f32 %v1547, 1.0
        %v1552 = vadd.f32 %v1549, 1.0
        %v1553 = vrcp.pop %v1550
        %v1554 = vmul.f32 %v1550, %v1553
        %v1555 = vsub.f32 1.0, %v1554
        %v1556 = vmul.f32 %v1553, %v1555
        %v1557 = vadd.f32 %v1553, %v1556
        %vm1558 = vweird.f32 %v1550
        %vm1559 = vweird.f32 %v1553
        %vm1560 = vmor %vm1558, %vm1559
        %v1561 = vsel %vm1560, %v1553, %v1557
        %v1562 = vand.u32 2147483647, %v1550
        %vm1563 = vcmp.eq.f32.partialorder %v1562, 8.507059e+37
        %v1564 = vand.u32 %v1550, 2147483648
        %v1565 = vor.u32 1.1754944e-38, %v1564
        %v1566 = vsel %vm1563, %v1565, %v1561
        %v1567 = vmul.f32 1.0, %v1566
        %v1568 = vrcp.pop %v1551
        %v1569 = vmul.f32 %v1551, %v1568
        %v1570 = vsub.f32 1.0, %v1569
        %v1571 = vmul.f32 %v1568, %v1570
        %v1572 = vadd.f32 %v1568, %v1571
        %vm1573 = vweird.f32 %v1551
        %vm1574 = vweird.f32 %v1568
        %vm1575 = vmor %vm1573, %vm1574
        %v1576 = vsel %vm1575, %v1568, %v1572
        %v1577 = vand.u32 2147483647, %v1551
        %vm1578 = vcmp.eq.f32.partialorder %v1577, 8.507059e+37
        %v1579 = vand.u32 %v1551, 2147483648
        %v1580 = vor.u32 1.1754944e-38, %v1579
        %v1581 = vsel %vm1578, %v1580, %v1576
        %v1582 = vmul.f32 1.0, %v1581
        %v1583 = vrcp.pop %v1552
        %v1584 = vmul.f32 %v1552, %v1583
        %v1585 = vsub.f32 1.0, %v1584
        %v1586 = vmul.f32 %v1583, %v1585
        %v1587 = vadd.f32 %v1583, %v1586
        %vm1588 = vweird.f32 %v1552
        %vm1589 = vweird.f32 %v1583
        %vm1590 = vmor %vm1588, %vm1589
        %v1591 = vsel %vm1590, %v1583, %v1587
        %v1592 = vand.u32 2147483647, %v1552
        %vm1593 = vcmp.eq.f32.partialorder %v1592, 8.507059e+37
        %v1594 = vand.u32 %v1552, 2147483648
        %v1595 = vor.u32 1.1754944e-38, %v1594
        %v1596 = vsel %vm1593, %v1595, %v1591
        %v1597 = vmul.f32 1.0, %v1596
        %v1598 = vmul.f32 %v1538, %v1567
        %v1599 = vmul.f32 %v1539, %v1582
        %v1600 = vmul.f32 %v1540, %v1597
        %s1601 = scalar_lea.vmem %s2, 80
        %v1602 = vld [vmem:[%s1601] sm:$0xff]
        %v1603 = vld [vmem:[%s1601 + $0x8] sm:$0xff]
        %s1604 = scalar_lea.vmem %s3, 80
        %v1605 = vld [vmem:[%s1604] sm:$0xff]
        %v1606 = vld [vmem:[%s1604 + $0x8] sm:$0xff]
        %1608 = vset.pattern.permute.xlu0 0
        %1609 = vperm.xlu0 %1608, %v1605
        %v1610 = vpop.permute.xlu0 %1609
        %1612 = vset.pattern.permute.xlu0 0
        %1613 = vperm.xlu0 %1612, %v1606
        %v1614 = vpop.permute.xlu0 %1613
        %v1617 = vsel %vm404, %v1602, 0
        %v1620 = vsel %vm404, %v1603, 0
        %1622 = vmatpush.msra.mxu0 0.0
        %1623 = vmatpush.msra.mxu0 0.0
        %1624 = vmatpush.msra.mxu0 0.0
        %1625 = vmatpush.msra.mxu0 0.0
        %1626 = vmatpush.msra.mxu0 0.0
        %1627 = vmatpush.msra.mxu0 0.0
        %1628 = vmatpush.msra.mxu0 0.0
        %1629 = vmatpush.msra.mxu0 0.0
        %1630 = vmatpush.msra.mxu0 0.0
        %1631 = vmatpush.msra.mxu0 0.0
        %1632 = vmatpush.msra.mxu0 0.0
        %1633 = vmatpush.msra.mxu0 0.0
        %1634 = vmatpush.msra.mxu0 0.0
        %1635 = vmatpush.msra.mxu0 0.0
        %1636 = vmatpush.msra.mxu0 0.0
        %1637 = vmatpush.msra.mxu0 %v1598
        %1638 = vmatmul.f32.gmra.mxu0 %v1617
        %v1639 = vpop.f32.mrf.mxu0
        %1640 = vmatmul.f32.gmra.mxu0 %v1620
        %v1641 = vpop.f32.mrf.mxu0
        %v1642 = vadd.f32 %v1614, %v1641
        %1643 = vdwg.mxu0
        %1644 = vmatpush.msra.mxu0 0.0
        %1645 = vmatpush.msra.mxu0 0.0
        %1646 = vmatpush.msra.mxu0 0.0
        %1647 = vmatpush.msra.mxu0 0.0
        %1648 = vmatpush.msra.mxu0 0.0
        %1649 = vmatpush.msra.mxu0 0.0
        %1650 = vmatpush.msra.mxu0 0.0
        %1651 = vmatpush.msra.mxu0 0.0
        %1652 = vmatpush.msra.mxu0 0.0
        %1653 = vmatpush.msra.mxu0 0.0
        %1654 = vmatpush.msra.mxu0 0.0
        %1655 = vmatpush.msra.mxu0 0.0
        %1656 = vmatpush.msra.mxu0 0.0
        %1657 = vmatpush.msra.mxu0 0.0
        %1658 = vmatpush.msra.mxu0 0.0
        %1659 = vmatpush.msra.mxu0 %v1599
        %1660 = vmatmul.f32.gmra.mxu0 %v1617
        %v1661 = vpop.f32.mrf.mxu0
        %1662 = vmatmul.f32.gmra.mxu0 %v1620
        %v1663 = vpop.f32.mrf.mxu0
        %v1664 = vadd.f32 %v1614, %v1663
        %1665 = vdwg.mxu0
        %1666 = vmatpush.msra.mxu0 0.0
        %1667 = vmatpush.msra.mxu0 0.0
        %1668 = vmatpush.msra.mxu0 0.0
        %1669 = vmatpush.msra.mxu0 0.0
        %1670 = vmatpush.msra.mxu0 0.0
        %1671 = vmatpush.msra.mxu0 0.0
        %1672 = vmatpush.msra.mxu0 0.0
        %1673 = vmatpush.msra.mxu0 0.0
        %1674 = vmatpush.msra.mxu0 0.0
        %1675 = vmatpush.msra.mxu0 0.0
        %1676 = vmatpush.msra.mxu0 0.0
        %1677 = vmatpush.msra.mxu0 0.0
        %1678 = vmatpush.msra.mxu0 0.0
        %1679 = vmatpush.msra.mxu0 0.0
        %1680 = vmatpush.msra.mxu0 0.0
        %1681 = vmatpush.msra.mxu0 %v1600
        %1682 = vmatmul.f32.gmra.mxu0 %v1617
        %v1683 = vpop.f32.mrf.mxu0
        %1684 = vmatmul.f32.gmra.mxu0 %v1620
        %v1685 = vpop.f32.mrf.mxu0
        %v1686 = vadd.f32 %v1614, %v1685
        %1687 = vdwg.mxu0
        %s1688 = scalar_lea.vmem %s215, 120 [#allocation3]
        %1689 = vst [vmem:[%s1688] sm:$0xff] %v1642
        %1690 = vst [vmem:[%s1688 + $0x8] sm:$0xff] %v1664
        %1691 = vst [vmem:[%s1688 + $0x10] sm:$0xff] %v1686
        %s1692 = sand.u32 %s131, 1
        %s1693 = scalar_lea.sflag [#allocation4], %s1692
        %s1694 = sand.u32 %s131, 1
        %s1695 = smul.addr %s1694, 144
        %s1696 = scalar_lea.vmem [#allocation3], %s1695
        // Predicated region
        $region41: #{tpu_custom_call.1} parent=35 // pred_check
          %p1697 = pneg %p141
        $region42: #{tpu_custom_call.1} parent=35 // pred_check_branch
          %1699 = sbr.rel (%p1697) target = $region44
        $region43: #{tpu_custom_call.1} parent=35 // pred_region
          %s1700 = smul.u32 3, %s23
          %1702 = vsyncadd %s1693, 0
          %s1703 = smul.addr %s22, 3
          %s1704 = sadd.s32 %s1700, %s1703
          %s1705 = smul.addr %s1704, 8
          %s1706 = scalar_lea.hbm %s4, %s1705
          %s1707 = sshll.u32 %s1696, 4
          %s1708 = int_to_ptr.vmem [resolvable:$true] %s1707
          %s1709 = sshll.u32 %s1706, 4
          %s1710 = int_to_ptr.hbm [resolvable:$true] %s1709
          %1715 = dma.vmem_to_hbm [thread:$0]  %s1708, 2304, %s1710, %s1693, 384, 768, 24
        $region44: #{tpu_custom_call.1} parent=35 // pred_fallthru
          _
      $region36: #{tpu_custom_call.1} parent=5 // pred_fallthru
        _
      %p1716 = scmp.le.s32.totalorder 2, %s13
      // Predicated region
      $region45: #{tpu_custom_call.1} parent=5 // pred_check
        %p1717 = pneg %p1716
      $region46: #{tpu_custom_call.1} parent=5 // pred_check_branch
        %1719 = sbr.rel (%p1717) target = $region48
      $region47: #{tpu_custom_call.1} parent=5 // pred_region
        %s1720 = ssub.s32 %s13, 2
        // Predicated region
        $region49: #{tpu_custom_call.1} parent=47 // pred_check
          %p1721 = pneg %p147
        $region50: #{tpu_custom_call.1} parent=47 // pred_check_branch
          %1723 = sbr.rel (%p1721) target = $region52
        $region51: #{tpu_custom_call.1} parent=47 // pred_region
          %s1724 = sand.u32 %s132, 1
          %s1725 = scalar_lea.sflag [#allocation4], %s1724
          %s1726 = sand.u32 %s132, 1
          %s1727 = smul.addr %s1726, 144
          %s1728 = scalar_lea.vmem [#allocation3], %s1727
          %1730 = dma.done %s1725, 2304
        $region52: #{tpu_custom_call.1} parent=47 // pred_fallthru
          _
      $region48: #{tpu_custom_call.1} parent=5 // pred_fallthru
        _
    $region6: #{tpu_custom_call.1} parent=1 // loop_footer
      %s17 = sadd.s32 1, %s13
    $region7: #{tpu_custom_call.1} parent=1 // loop_footer_branch
      %12 = sbr.rel target = $region3
    $region8: #{tpu_custom_call.1} parent=1 // loop_exit
      _
    %1731 = vsyncpa [#allocation4], 1
    %s1732 = scalar_lea.sflag [#allocation4], 1
    %1733 = vsyncpa %s1732, 1

</llo_original>
